<compile_context>
chip_gen: v5e
topology: v5e:2x2
jax: 0.10.0
libtpu: 0.0.40
codegen_flags: <defaults>
</compile_context>

<pallas_src>
import jax
import jax.numpy as jnp
from jax.experimental import pallas as pl
from jax.experimental.pallas import tpu as pltpu

H1 = 512  # hidden sizes fixed by the PyTorch module
H2 = 256


def _round_up(x, m):
    return ((x + m - 1) // m) * m


def _leaky_relu(x, slope=0.2):
    return jnp.where(x > 0, x, slope * x)


def _vmem_budget_bytes():
    """~3/4 of this generation's VMEM (48 MiB on v7x, 96 MiB on v5e/v6e)."""
    cap = None
    try:
        cap = getattr(pltpu.get_tpu_info(), "vmem_capacity_bytes", None)
    except Exception:
        cap = None
    if not cap:
        cap = 64 * 1024 * 1024  # conservative (v7x) fallback
    return (cap * 3) // 4


def _pick_tb(batch, tb_max=256):
    # Aim for >= 2 batch tiles once B >= 32 so the "parallel" axis can feed
    # both v7x TensorCores; 16-row multiples for bf16 sublane packing.
    return min(tb_max, max(16, _round_up((batch + 1) // 2, 16)))


def _pick_tk(in_features, vmem_budget, tb_for_estimate=256):
    """Largest layer-1 K tile (multiple of 128) whose conservative VMEM
    footprint fits the budget.  When the whole padded reduction fits, K is a
    single tile and W1 stays resident in VMEM across all batch tiles."""
    k_full = _round_up(in_features, 128)

    def est(tk):
        return (2 * tb_for_estimate * tk * 4      # x tile (f32, double-buffered)
                + 2 * tk * H1 * 2                 # W1 tile (bf16, double-buffered)
                + tb_for_estimate * H1 * 4        # f32 accumulator scratch
                + H1 * H2 * 2                     # W2 (resident)
                + 2 * tb_for_estimate * 128 * 4   # output tile (double-buffered)
                + 4 * (H1 + H2 + 128) * 4)        # bias rows / W3 row / misc

    if est(k_full) <= vmem_budget:
        return k_full
    tk = min(k_full, 4096)
    while tk > 128 and est(tk) > vmem_budget:
        tk -= 128
    return max(tk, 128)


def prepare_params(params, in_features, *, tb_max=256):
    """One-time conversion of PyTorch-style params into kernel-ready padded /
    cast arrays.  Cache the result across forward calls so weight casts and
    padding are not re-done (and re-streamed through HBM) every step."""
    w1, b1, w2, b2, w3, b3 = params
    budget = _vmem_budget_bytes()
    tk = _pick_tk(in_features, budget, tb_for_estimate=tb_max)
    k_pad = _round_up(in_features, tk)

    w1_p = jnp.zeros((k_pad, H1), jnp.bfloat16).at[:in_features, :].set(
        w1.astype(jnp.bfloat16))
    return {
        "w1": w1_p,                                   # (K_pad, 512) bf16
        "b1": b1.reshape(1, H1).astype(jnp.float32),  # (1, 512) f32
        "w2": w2.astype(jnp.bfloat16),                # (512, 256) bf16 (resident)
        "b2": b2.reshape(1, H2).astype(jnp.float32),  # (1, 256) f32
        "w3": w3.reshape(1, H2).astype(jnp.float32),  # (256,1) -> (1,256) row
        "b3": b3.reshape(1).astype(jnp.float32),      # (1,) f32 -> SMEM scalar
        "in_features": in_features,
        "tk": tk,
        "k_pad": k_pad,
        "tb_max": tb_max,
        "vmem_limit": int(budget),
    }


def discriminator_kernel(x_ref, w1_ref, b1_ref, w2_ref, b2_ref, w3_ref, b3_ref,
                         o_ref, acc_ref):
    """grid = (batch tiles [parallel], layer-1 K tiles [arbitrary])."""
    k = pl.program_id(1)

    # --- Layer 1: acc = b1 + sum_k x_tile(bf16) @ W1_tile(bf16), f32 accumulate.
    @pl.when(k == 0)
    def _():
        acc_ref[...] = jnp.broadcast_to(b1_ref[...], acc_ref.shape)

    acc_ref[...] += jnp.dot(x_ref[...].astype(jnp.bfloat16), w1_ref[...],
                            preferred_element_type=jnp.float32)

    # --- Epilogue on the last K step: LeakyReLU, layer 2, layer 3, sigmoid.
    @pl.when(k == pl.num_programs(1) - 1)
    def _():
        h1 = _leaky_relu(acc_ref[...])

        h2 = jnp.dot(h1.astype(jnp.bfloat16), w2_ref[...],
                     preferred_element_type=jnp.float32) + b2_ref[...]
        h2 = _leaky_relu(h2)

        # Layer 3 has N=1: VPU multiply + XLU cross-lane reduce beats a
        # badly-shaped (TB,256)@(256,1) MXU matmul.  b3 read from SMEM.
        h3 = jnp.sum(h2 * w3_ref[...], axis=-1, keepdims=True) + b3_ref[0]

        # Exact EUP reciprocal: approx=True can overshoot 1.0 on the sigmoid.
        sig = pl.reciprocal(1.0 + jnp.exp(-h3))
        # Lane-dense store: broadcast across 128 lanes; wrapper keeps column 0.
        o_ref[...] = jnp.broadcast_to(sig, o_ref.shape)


def discriminator_forward(img, prepared):
    """img: (B, C, H, W) -> validity: (B, 1) float32."""
    B = img.shape[0]
    in_feat = prepared["in_features"]
    tk = prepared["tk"]
    k_pad = prepared["k_pad"]

    x = img.reshape(B, -1).astype(jnp.float32)      # == torch img.view(B, -1)
    assert x.shape[1] == in_feat

    TB = _pick_tb(B, prepared["tb_max"])
    B_pad = _round_up(B, TB)
    if B_pad != B or k_pad != in_feat:              # remainder-only zero pad
        x = jnp.pad(x, ((0, B_pad - B), (0, k_pad - in_feat)))

    n_b = B_pad // TB
    n_k = k_pad // tk

    out = pl.pallas_call(
        discriminator_kernel,
        out_shape=jax.ShapeDtypeStruct((B_pad, 128), jnp.float32),
        grid_spec=pltpu.PrefetchScalarGridSpec(
            num_scalar_prefetch=0,
            grid=(n_b, n_k),
            in_specs=[
                pl.BlockSpec((TB, tk), lambda i, k: (i, k)),    # x tile (f32)
                pl.BlockSpec((tk, H1), lambda i, k: (k, 0)),    # W1 (resident if n_k==1)
                pl.BlockSpec((1, H1), lambda i, k: (0, 0)),     # b1 (resident)
                pl.BlockSpec((H1, H2), lambda i, k: (0, 0)),    # W2 (resident)
                pl.BlockSpec((1, H2), lambda i, k: (0, 0)),     # b2 (resident)
                pl.BlockSpec((1, H2), lambda i, k: (0, 0)),     # W3 row (resident)
                pl.BlockSpec(memory_space=pltpu.MemorySpace.SMEM),  # b3 scalar
            ],
            out_specs=pl.BlockSpec((TB, 128), lambda i, k: (i, 0)),
            scratch_shapes=[pltpu.VMEM((TB, H1), jnp.float32)],
        ),
        compiler_params=pltpu.CompilerParams(
            dimension_semantics=("parallel", "arbitrary"),
            vmem_limit_bytes=prepared["vmem_limit"],
        ),
    )(x, prepared["w1"], prepared["b1"], prepared["w2"], prepared["b2"],
      prepared["w3"], prepared["b3"])

    return out[:B, :1]


def init_params(key, in_features):
    """Deterministic init mimicking PyTorch Linear default (U[-1/sqrt(fan_in), +])."""
    dims = [(in_features, H1), (H1, H2), (H2, 1)]
    params = []
    for fan_in, fan_out in dims:
        key, kw, kb = jax.random.split(key, 3)
        bound = 1.0 / jnp.sqrt(fan_in)
        w = jax.random.uniform(kw, (fan_in, fan_out), jnp.float32,
                               minval=-bound, maxval=bound)
        b = jax.random.uniform(kb, (1, fan_out), jnp.float32,
                               minval=-bound, maxval=bound)
        params.extend([w, b])
    return tuple(params)


def _reference_forward(img, params):
    """Pure-JAX f32 reference of the PyTorch module."""
    w1, b1, w2, b2, w3, b3 = params
    x = img.reshape(img.shape[0], -1)
    h = x @ w1 + b1
    h = jnp.where(h > 0, h, 0.2 * h)
    h = h @ w2 + b2
    h = jnp.where(h > 0, h, 0.2 * h)
    h = h @ w3 + b3
    return jax.nn.sigmoid(h)


if __name__ == "__main__":
    # Small config consistent with the module (BGAN defaults): channels=1,
    # img_size=28 -> 784 input features (also exercises the K remainder pad).
    B, C, Hs, Ws = 2, 1, 28, 28
    key = jax.random.PRNGKey(0)
    k_img, k_params = jax.random.split(key)

    img = jax.random.normal(k_img, (B, C, Hs, Ws), dtype=jnp.float32)
    params = init_params(k_params, C * Hs * Ws)

    prepared = prepare_params(params, C * Hs * Ws)   # cast/pad weights ONCE
    validity = discriminator_forward(img, prepared)
    jax.block_until_ready(validity)

    ref = _reference_forward(img, params)
    assert validity.shape == (B, 1)
    assert bool(jnp.all((validity >= 0.0) & (validity <= 1.0)))
    # bf16 matmuls: generous tolerance on sigmoid outputs.
    assert bool(jnp.max(jnp.abs(validity - ref)) < 5e-2)
    print("KERNEL_OK")
</pallas_src>

<mosaic_0001>
module attributes {stable_mosaic.version = 11 : i64} {
  func.func @discriminator_kernel(%arg0: i32, %arg1: i32, %arg2: memref<16x896xf32, #tpu.memory_space<vmem>>, %arg3: memref<896x512xbf16, #tpu.memory_space<vmem>>, %arg4: memref<1x512xf32, #tpu.memory_space<vmem>>, %arg5: memref<512x256xbf16, #tpu.memory_space<vmem>>, %arg6: memref<1x256xf32, #tpu.memory_space<vmem>>, %arg7: memref<1x256xf32, #tpu.memory_space<vmem>>, %arg8: memref<1xf32, #tpu.memory_space<smem>>, %arg9: memref<16x128xf32, #tpu.memory_space<vmem>>, %arg10: memref<16x512xf32, #tpu.memory_space<vmem>>) attributes {dimension_semantics = [#tpu.dimension_semantics<parallel>, #tpu.dimension_semantics<arbitrary>], iteration_bounds = array<i64: 1, 1>, scalar_prefetch = 0 : i64, scratch_operands = 1 : i64, tpu.core_type = #tpu.core_type<tc>, window_params = [{transform_indices = @transform_0, window_bounds = array<i64: 16, 896>}, {transform_indices = @transform_1, window_bounds = array<i64: 896, 512>}, {pipeline_mode = #tpu.pipeline_mode<synchronous>, transform_indices = @transform_2, window_bounds = array<i64: 1, 512>}, {pipeline_mode = #tpu.pipeline_mode<synchronous>, transform_indices = @transform_3, window_bounds = array<i64: 512, 256>}, {pipeline_mode = #tpu.pipeline_mode<synchronous>, transform_indices = @transform_4, window_bounds = array<i64: 1, 256>}, {pipeline_mode = #tpu.pipeline_mode<synchronous>, transform_indices = @transform_5, window_bounds = array<i64: 1, 256>}, {transform_indices = @transform_6, window_bounds = array<i64: 1>}, {transform_indices = @transform_7, window_bounds = array<i64: 16, 128>}]} {
    %c0_i32 = arith.constant 0 : i32
    %0 = arith.cmpi eq, %arg1, %c0_i32 : i32
    %1 = arith.extui %0 : i1 to i32
    %c0_i32_0 = arith.constant 0 : i32
    %2 = arith.cmpi ne, %1, %c0_i32_0 : i32
    scf.if %2 {
      %c0_10 = arith.constant 0 : index
      %c0_11 = arith.constant 0 : index
      %13 = vector.load %arg4[%c0_10, %c0_11] : memref<1x512xf32, #tpu.memory_space<vmem>>, vector<1x512xf32>
      %14 = vector.shape_cast %13 : vector<1x512xf32> to vector<1x512xf32>
      %15 = vector.broadcast %14 : vector<1x512xf32> to vector<16x512xf32>
      %c0_12 = arith.constant 0 : index
      %c0_13 = arith.constant 0 : index
      %16 = vector.load %arg10[%c0_12, %c0_13] : memref<16x512xf32, #tpu.memory_space<vmem>>, vector<16x512xf32>
      tpu.vector_store %arg10[%c0_12, %c0_13], %15 {strides = array<i32>} : memref<16x512xf32, #tpu.memory_space<vmem>>, vector<16x512xf32>,
    } else {
    }
    %c0 = arith.constant 0 : index
    %c0_1 = arith.constant 0 : index
    %3 = vector.load %arg10[%c0, %c0_1] : memref<16x512xf32, #tpu.memory_space<vmem>>, vector<16x512xf32>
    %c0_2 = arith.constant 0 : index
    %c0_3 = arith.constant 0 : index
    %4 = vector.load %arg2[%c0_2, %c0_3] : memref<16x896xf32, #tpu.memory_space<vmem>>, vector<16x896xf32>
    %5 = arith.truncf %4 : vector<16x896xf32> to vector<16x896xbf16>
    %c0_4 = arith.constant 0 : index
    %c0_5 = arith.constant 0 : index
    %6 = vector.load %arg3[%c0_4, %c0_5] : memref<896x512xbf16, #tpu.memory_space<vmem>>, vector<896x512xbf16>
    %cst = arith.constant dense<0.000000e+00> : vector<16x512xf32>
    %7 = tpu.matmul %5, %6, %cst {dimension_numbers = #tpu.dot_dimension_numbers<[1], [0], [0], [1], [0, 0, 1, 1], [], []>} : vector<16x896xbf16>, vector<896x512xbf16>, vector<16x512xf32> -> vector<16x512xf32>
    %8 = arith.addf %3, %7 : vector<16x512xf32>
    %c0_6 = arith.constant 0 : index
    %c0_7 = arith.constant 0 : index
    %9 = vector.load %arg10[%c0_6, %c0_7] : memref<16x512xf32, #tpu.memory_space<vmem>>, vector<16x512xf32>
    tpu.vector_store %arg10[%c0_6, %c0_7], %8 {strides = array<i32>} : memref<16x512xf32, #tpu.memory_space<vmem>>, vector<16x512xf32>,
    %c0_i32_8 = arith.constant 0 : i32
    %10 = arith.cmpi eq, %arg1, %c0_i32_8 : i32
    %11 = arith.extui %10 : i1 to i32
    %c0_i32_9 = arith.constant 0 : i32
    %12 = arith.cmpi ne, %11, %c0_i32_9 : i32
    scf.if %12 {
      %c0_10 = arith.constant 0 : index
      %c0_11 = arith.constant 0 : index
      %13 = vector.load %arg10[%c0_10, %c0_11] : memref<16x512xf32, #tpu.memory_space<vmem>>, vector<16x512xf32>
      %cst_12 = arith.constant 0.000000e+00 : f32
      %14 = vector.broadcast %cst_12 : f32 to vector<16x512xf32>
      %15 = arith.cmpf ogt, %13, %14 : vector<16x512xf32>
      %cst_13 = arith.constant 2.000000e-01 : f32
      %16 = vector.broadcast %cst_13 : f32 to vector<16x512xf32>
      %17 = arith.mulf %16, %13 : vector<16x512xf32>
      %18 = arith.select %15, %13, %17 : vector<16x512xi1>, vector<16x512xf32>
      %19 = arith.truncf %18 : vector<16x512xf32> to vector<16x512xbf16>
      %c0_14 = arith.constant 0 : index
      %c0_15 = arith.constant 0 : index
      %20 = vector.load %arg5[%c0_14, %c0_15] : memref<512x256xbf16, #tpu.memory_space<vmem>>, vector<512x256xbf16>
      %cst_16 = arith.constant dense<0.000000e+00> : vector<16x256xf32>
      %21 = tpu.matmul %19, %20, %cst_16 {dimension_numbers = #tpu.dot_dimension_numbers<[1], [0], [0], [1], [0, 0, 1, 1], [], []>} : vector<16x512xbf16>, vector<512x256xbf16>, vector<16x256xf32> -> vector<16x256xf32>
      %c0_17 = arith.constant 0 : index
      %c0_18 = arith.constant 0 : index
      %22 = vector.load %arg6[%c0_17, %c0_18] : memref<1x256xf32, #tpu.memory_space<vmem>>, vector<1x256xf32>
      %23 = vector.broadcast %22 : vector<1x256xf32> to vector<16x256xf32>
      %24 = arith.addf %21, %23 : vector<16x256xf32>
      %cst_19 = arith.constant 0.000000e+00 : f32
      %25 = vector.broadcast %cst_19 : f32 to vector<16x256xf32>
      %26 = arith.cmpf ogt, %24, %25 : vector<16x256xf32>
      %cst_20 = arith.constant 2.000000e-01 : f32
      %27 = vector.broadcast %cst_20 : f32 to vector<16x256xf32>
      %28 = arith.mulf %27, %24 : vector<16x256xf32>
      %29 = arith.select %26, %24, %28 : vector<16x256xi1>, vector<16x256xf32>
      %c0_21 = arith.constant 0 : index
      %c0_22 = arith.constant 0 : index
      %30 = vector.load %arg7[%c0_21, %c0_22] : memref<1x256xf32, #tpu.memory_space<vmem>>, vector<1x256xf32>
      %31 = vector.broadcast %30 : vector<1x256xf32> to vector<16x256xf32>
      %32 = arith.mulf %29, %31 : vector<16x256xf32>
      %cst_23 = arith.constant dense<0.000000e+00> : vector<16xf32>
      %33 = vector.multi_reduction <add>, %32, %cst_23 [1] : vector<16x256xf32> to vector<16xf32>
      %34 = vector.shape_cast %33 : vector<16xf32> to vector<16x1xf32>
      %c0_24 = arith.constant 0 : index
      %35 = memref.load %arg8[%c0_24] : memref<1xf32, #tpu.memory_space<smem>>
      %36 = vector.broadcast %35 : f32 to vector<16x1xf32>
      %37 = arith.addf %34, %36 : vector<16x1xf32>
      %cst_25 = arith.constant 0.000000e+00 : f32
      %38 = vector.broadcast %cst_25 : f32 to vector<16x1xf32>
      %39 = arith.subf %38, %37 : vector<16x1xf32>
      %40 = math.exp %39 : vector<16x1xf32>
      %cst_26 = arith.constant 1.000000e+00 : f32
      %41 = vector.broadcast %cst_26 : f32 to vector<16x1xf32>
      %42 = arith.addf %41, %40 : vector<16x1xf32>
      %43 = tpu.reciprocal %42 : vector<16x1xf32> -> vector<16x1xf32>
      %44 = vector.shape_cast %43 : vector<16x1xf32> to vector<16x1xf32>
      %45 = vector.broadcast %44 : vector<16x1xf32> to vector<16x128xf32>
      %c0_27 = arith.constant 0 : index
      %c0_28 = arith.constant 0 : index
      %46 = vector.load %arg9[%c0_27, %c0_28] : memref<16x128xf32, #tpu.memory_space<vmem>>, vector<16x128xf32>
      tpu.vector_store %arg9[%c0_27, %c0_28], %45 {strides = array<i32>} : memref<16x128xf32, #tpu.memory_space<vmem>>, vector<16x128xf32>,
    } else {
    }
    return
  }
  func.func @transform_0(%arg0: i32, %arg1: i32) -> (i32, i32) {
    %c0_i32 = arith.constant 0 : i32
    return %arg0, %arg1 : i32, i32
  }
  func.func @transform_1(%arg0: i32, %arg1: i32) -> (i32, i32) {
    %c0_i32 = arith.constant 0 : i32
    %c0_i32_0 = arith.constant 0 : i32
    return %arg1, %c0_i32 : i32, i32
  }
  func.func @transform_2(%arg0: i32, %arg1: i32) -> (i32, i32) {
    %c0_i32 = arith.constant 0 : i32
    %c0_i32_0 = arith.constant 0 : i32
    %c0_i32_1 = arith.constant 0 : i32
    return %c0_i32, %c0_i32_0 : i32, i32
  }
  func.func @transform_3(%arg0: i32, %arg1: i32) -> (i32, i32) {
    %c0_i32 = arith.constant 0 : i32
    %c0_i32_0 = arith.constant 0 : i32
    %c0_i32_1 = arith.constant 0 : i32
    return %c0_i32, %c0_i32_0 : i32, i32
  }
  func.func @transform_4(%arg0: i32, %arg1: i32) -> (i32, i32) {
    %c0_i32 = arith.constant 0 : i32
    %c0_i32_0 = arith.constant 0 : i32
    %c0_i32_1 = arith.constant 0 : i32
    return %c0_i32, %c0_i32_0 : i32, i32
  }
  func.func @transform_5(%arg0: i32, %arg1: i32) -> (i32, i32) {
    %c0_i32 = arith.constant 0 : i32
    %c0_i32_0 = arith.constant 0 : i32
    %c0_i32_1 = arith.constant 0 : i32
    return %c0_i32, %c0_i32_0 : i32, i32
  }
  func.func @transform_6(%arg0: i32, %arg1: i32) -> i32 {
    %c0_i32 = arith.constant 0 : i32
    %c0_i32_0 = arith.constant 0 : i32
    return %c0_i32 : i32
  }
  func.func @transform_7(%arg0: i32, %arg1: i32) -> (i32, i32) {
    %c0_i32 = arith.constant 0 : i32
    %c0_i32_0 = arith.constant 0 : i32
    return %arg0, %c0_i32 : i32, i32
  }
}

</mosaic_0001>

<llo_original>
// kernel: tpu_custom_call.1
$region0: #{tpu_custom_call.1}
  #allocation0 [shape = 'u32[]', space=smem, size = 0x4, offset = 0x4, fixed_abs, tag = 'smem constant byte address 0x4 - core index']
  #allocation1 [shape = 'u32[72,128]{1,0:T(1,128)}', space=vmem, size = 0x9000, scoped, tag = 'internal scratch']
  #allocation2 [shape = 'f32[16,512]{1,0:T(8,128)}', space=vmem, size = 0x8000, scoped, tag = 'scratch operand']
  #allocation3 [shape = 'f32[1]{0:T(128)S(6)}', space=smem, size = 0x200, scoped, tag = 'scoped memory for tpu_custom_call.1']
  %s0 = inlined_call_operand.hbm [shape: f32[16,896], index: 0, kind: input, shape index: {}]
  %s1 = inlined_call_operand.hbm [shape: bf16[896,512], index: 1, kind: input, shape index: {}]
  %s2 = inlined_call_operand.hbm [shape: f32[1,512], index: 2, kind: input, shape index: {}]
  %s3 = inlined_call_operand.hbm [shape: bf16[512,256], index: 3, kind: input, shape index: {}]
  %s4 = inlined_call_operand.vmem [shape: f32[1,256], index: 4, kind: input, shape index: {}]
  %s5 = inlined_call_operand.vmem [shape: f32[1,256], index: 5, kind: input, shape index: {}]
  %s6 = inlined_call_operand.<no memory space> [shape: f32[1], index: 6, kind: input, shape index: {}]
  %s7 = inlined_call_operand.hbm [shape: f32[16,128], index: 7, kind: output, shape index: {}]
  %s8 = sld [smem:[#allocation0]]
  $region62: #{tpu_custom_call.1} parent=0
    _
  %s10 = ssub.s32 1, %s8
  %s11 = scalar_select 0, %s10, %s8
  %12 = sst [smem:[#allocation3]] %s6
  $region1: #{tpu_custom_call.1} parent=0
    #allocation4 [shape = 'u8[57344]{0}', space=vmem, size = 0xe000, scoped, tag = 'input window, operand 0, single buffered']
    #allocation5 [shape = 's32[1]{0}', space=sflag, size = 0x4, scoped, tag = 'scoped memory for tpu_custom_call.1']
    #allocation6 [shape = 's32[1]{0}', space=sflag, size = 0x4, scoped, tag = 'scoped memory for tpu_custom_call.1']
    #allocation7 [shape = 'u8[917504]{0}', space=vmem, size = 0xe0000, scoped, tag = 'input window, operand 1, single buffered']
    #allocation8 [shape = 's32[1]{0}', space=sflag, size = 0x4, scoped, tag = 'scoped memory for tpu_custom_call.1']
    #allocation9 [shape = 'u8[2048]{0}', space=vmem, size = 0x800, scoped, tag = 'input window, operand 2, single buffered']
    #allocation10 [shape = 'u8[262144]{0}', space=vmem, size = 0x40000, scoped, tag = 'input window, operand 3, single buffered']
    #allocation11 [shape = 's32[1]{0}', space=sflag, size = 0x4, scoped, tag = 'scoped memory for tpu_custom_call.1']
    #allocation12 [shape = 'u8[8192]{0}', space=vmem, size = 0x2000, scoped, tag = 'output window, operand 0, single buffered']
    %13 = vsyncpa [#allocation5], 0
    %14 = vsyncpa [#allocation8], 0
    %15 = vsyncpa [#allocation11], 0
    %16 = vsyncpa [#allocation6], 0
    // Predicated region
    $region2: #{tpu_custom_call.1} parent=1 // pred_check
      _
    $region3: #{tpu_custom_call.1} parent=1 // pred_check_branch
      %18 = sbr.rel (0) target = $region5
    $region4: #{tpu_custom_call.1} parent=1 // pred_region
      %20 = vsyncadd [#allocation5], 0
      %s21 = sshll.u32 %s0, 4
      %s22 = int_to_ptr.hbm [resolvable:$true] %s21
      %s23 = sshll.u32 [#allocation4], 4
      %s24 = int_to_ptr.vmem [resolvable:$true] %s23
      %29 = dma.hbm_to_vmem [thread:$0]  %s22, 1792, %s24, [#allocation5], 896, 896, 56
    $region5: #{tpu_custom_call.1} parent=1 // pred_fallthru
      _
    // Predicated region
    $region6: #{tpu_custom_call.1} parent=1 // pred_check
      _
    $region7: #{tpu_custom_call.1} parent=1 // pred_check_branch
      %31 = sbr.rel (0) target = $region9
    $region8: #{tpu_custom_call.1} parent=1 // pred_region
      %33 = vsyncadd [#allocation8], 0
      %s34 = sshll.u32 %s1, 4
      %s35 = int_to_ptr.hbm [resolvable:$true] %s34
      %s36 = sshll.u32 [#allocation7], 4
      %s37 = int_to_ptr.vmem [resolvable:$true] %s36
      %42 = dma.hbm_to_vmem [thread:$0]  %s35, 28672, %s37, [#allocation8], 256, 256, 16
    $region9: #{tpu_custom_call.1} parent=1 // pred_fallthru
      _
    // Predicated region
    $region10: #{tpu_custom_call.1} parent=1 // pred_check
      _
    $region11: #{tpu_custom_call.1} parent=1 // pred_check_branch
      %44 = sbr.rel (0) target = $region13
    $region12: #{tpu_custom_call.1} parent=1 // pred_region
      %46 = vsyncadd [#allocation8], 0
      %s48 = sshll.u32 %s2, 4
      %s49 = int_to_ptr.hbm [resolvable:$true] %s48
      %s50 = sshll.u32 [#allocation9], 4
      %s51 = int_to_ptr.vmem [resolvable:$true] %s50
      %53 = dma.hbm_to_vmem [thread:$0]  %s49, 64, %s51, [#allocation8]
    $region13: #{tpu_custom_call.1} parent=1 // pred_fallthru
      _
    // Predicated region
    $region14: #{tpu_custom_call.1} parent=1 // pred_check
      _
    $region15: #{tpu_custom_call.1} parent=1 // pred_check_branch
      %55 = sbr.rel (0) target = $region17
    $region16: #{tpu_custom_call.1} parent=1 // pred_region
      %57 = vsyncadd [#allocation11], 0
      %s58 = sshll.u32 %s3, 4
      %s59 = int_to_ptr.hbm [resolvable:$true] %s58
      %s60 = sshll.u32 [#allocation10], 4
      %s61 = int_to_ptr.vmem [resolvable:$true] %s60
      %66 = dma.hbm_to_vmem [thread:$0]  %s59, 8192, %s61, [#allocation11], 128, 128, 8
    $region17: #{tpu_custom_call.1} parent=1 // pred_fallthru
      _
    // Predicated region
    $region18: #{tpu_custom_call.1} parent=1 // pred_check
      _
    $region19: #{tpu_custom_call.1} parent=1 // pred_check_branch
      %68 = sbr.rel (0) target = $region21
    $region20: #{tpu_custom_call.1} parent=1 // pred_region
      _
    $region21: #{tpu_custom_call.1} parent=1 // pred_fallthru
      _
    // Predicated region
    $region22: #{tpu_custom_call.1} parent=1 // pred_check
      _
    $region23: #{tpu_custom_call.1} parent=1 // pred_check_branch
      %70 = sbr.rel (0) target = $region25
    $region24: #{tpu_custom_call.1} parent=1 // pred_region
      _
    $region25: #{tpu_custom_call.1} parent=1 // pred_fallthru
      _
    // Predicated region
    $region26: #{tpu_custom_call.1} parent=1 // pred_check
      _
    $region27: #{tpu_custom_call.1} parent=1 // pred_check_branch
      %72 = sbr.rel (0) target = $region29
    $region28: #{tpu_custom_call.1} parent=1 // pred_region
      _
    $region29: #{tpu_custom_call.1} parent=1 // pred_fallthru
      _
    // Predicated region
    $region30: #{tpu_custom_call.1} parent=1 // pred_check
      _
    $region31: #{tpu_custom_call.1} parent=1 // pred_check_branch
      %74 = sbr.rel (0) target = $region33
    $region32: #{tpu_custom_call.1} parent=1 // pred_region
      %76 = dma.done [#allocation5], 1792
    $region33: #{tpu_custom_call.1} parent=1 // pred_fallthru
      _
    // Predicated region
    $region34: #{tpu_custom_call.1} parent=1 // pred_check
      _
    $region35: #{tpu_custom_call.1} parent=1 // pred_check_branch
      %78 = sbr.rel (0) target = $region37
    $region36: #{tpu_custom_call.1} parent=1 // pred_region
      %80 = dma.done [#allocation8], 28672
    $region37: #{tpu_custom_call.1} parent=1 // pred_fallthru
      _
    // Predicated region
    $region38: #{tpu_custom_call.1} parent=1 // pred_check
      _
    $region39: #{tpu_custom_call.1} parent=1 // pred_check_branch
      %82 = sbr.rel (0) target = $region41
    $region40: #{tpu_custom_call.1} parent=1 // pred_region
      %84 = dma.done [#allocation8], 64
    $region41: #{tpu_custom_call.1} parent=1 // pred_fallthru
      _
    // Predicated region
    $region42: #{tpu_custom_call.1} parent=1 // pred_check
      _
    $region43: #{tpu_custom_call.1} parent=1 // pred_check_branch
      %86 = sbr.rel (0) target = $region45
    $region44: #{tpu_custom_call.1} parent=1 // pred_region
      %88 = dma.done [#allocation11], 8192
    $region45: #{tpu_custom_call.1} parent=1 // pred_fallthru
      _
    %p89 = scmp.eq.s32.totalorder 0, 0
    // Predicated region
    $region46: #{tpu_custom_call.1} parent=1 // pred_check
      %p90 = pneg %p89
    $region47: #{tpu_custom_call.1} parent=1 // pred_check_branch
      %92 = sbr.rel (%p90) target = $region49
    $region48: #{tpu_custom_call.1} parent=1 // pred_region
      %v93 = vld [vmem:[#allocation9] sm:$0xf]
      %v95 = vperm.slane %v93, 0
      %v96 = vperm.slane %v93, 1
      %v97 = vperm.slane %v93, 2
      %v98 = vperm.slane %v93, 3
      %103 = vst [vmem:[#allocation2] sm:$0xff] %v95
      %104 = vst [vmem:[#allocation2 + $0x8] sm:$0xff] %v96
      %105 = vst [vmem:[#allocation2 + $0x10] sm:$0xff] %v97
      %106 = vst [vmem:[#allocation2 + $0x18] sm:$0xff] %v98
      %107 = vst [vmem:[#allocation2 + $0x20] sm:$0xff] %v95
      %108 = vst [vmem:[#allocation2 + $0x28] sm:$0xff] %v96
      %109 = vst [vmem:[#allocation2 + $0x30] sm:$0xff] %v97
      %110 = vst [vmem:[#allocation2 + $0x38] sm:$0xff] %v98
    $region49: #{tpu_custom_call.1} parent=1 // pred_fallthru
      _
    %v111 = vld [vmem:[#allocation2] sm:$0xff]
    %v112 = vld [vmem:[#allocation2 + $0x8] sm:$0xff]
    %v113 = vld [vmem:[#allocation2 + $0x10] sm:$0xff]
    %v114 = vld [vmem:[#allocation2 + $0x18] sm:$0xff]
    %v115 = vld [vmem:[#allocation2 + $0x20] sm:$0xff]
    %v116 = vld [vmem:[#allocation2 + $0x28] sm:$0xff]
    %v117 = vld [vmem:[#allocation2 + $0x30] sm:$0xff]
    %v118 = vld [vmem:[#allocation2 + $0x38] sm:$0xff]
    %v119 = vld [vmem:[#allocation4] sm:$0xff]
    %v120 = vld [vmem:[#allocation4 + $0x8] sm:$0xff]
    %v121 = vld [vmem:[#allocation4 + $0x10] sm:$0xff]
    %v122 = vld [vmem:[#allocation4 + $0x18] sm:$0xff]
    %v123 = vld [vmem:[#allocation4 + $0x20] sm:$0xff]
    %v124 = vld [vmem:[#allocation4 + $0x28] sm:$0xff]
    %v125 = vld [vmem:[#allocation4 + $0x30] sm:$0xff]
    %v126 = vld [vmem:[#allocation4 + $0x38] sm:$0xff]
    %v127 = vld [vmem:[#allocation4 + $0x40] sm:$0xff]
    %v128 = vld [vmem:[#allocation4 + $0x48] sm:$0xff]
    %v129 = vld [vmem:[#allocation4 + $0x50] sm:$0xff]
    %v130 = vld [vmem:[#allocation4 + $0x58] sm:$0xff]
    %v131 = vld [vmem:[#allocation4 + $0x60] sm:$0xff]
    %v132 = vld [vmem:[#allocation4 + $0x68] sm:$0xff]
    %v133 = vpack.c.bf16 %v126, %v119
    %v134 = vpack.c.bf16 %v127, %v120
    %v135 = vpack.c.bf16 %v128, %v121
    %v136 = vpack.c.bf16 %v129, %v122
    %v137 = vpack.c.bf16 %v130, %v123
    %v138 = vpack.c.bf16 %v131, %v124
    %v139 = vpack.c.bf16 %v132, %v125
    %v140 = vld [vmem:[#allocation7] sm:$0xff]
    %v141 = vld [vmem:[#allocation7 + $0x8] sm:$0xff]
    %v142 = vld [vmem:[#allocation7 + $0x10] sm:$0xff]
    %v143 = vld [vmem:[#allocation7 + $0x18] sm:$0xff]
    %v144 = vld [vmem:[#allocation7 + $0x20] sm:$0xff]
    %v145 = vld [vmem:[#allocation7 + $0x28] sm:$0xff]
    %v146 = vld [vmem:[#allocation7 + $0x30] sm:$0xff]
    %v147 = vld [vmem:[#allocation7 + $0x38] sm:$0xff]
    %v148 = vld [vmem:[#allocation7 + $0x40] sm:$0xff]
    %v149 = vld [vmem:[#allocation7 + $0x48] sm:$0xff]
    %v150 = vld [vmem:[#allocation7 + $0x50] sm:$0xff]
    %v151 = vld [vmem:[#allocation7 + $0x58] sm:$0xff]
    %v152 = vld [vmem:[#allocation7 + $0x60] sm:$0xff]
    %v153 = vld [vmem:[#allocation7 + $0x68] sm:$0xff]
    %v154 = vld [vmem:[#allocation7 + $0x70] sm:$0xff]
    %v155 = vld [vmem:[#allocation7 + $0x78] sm:$0xff]
    %v156 = vld [vmem:[#allocation7 + $0x80] sm:$0xff]
    %v157 = vld [vmem:[#allocation7 + $0x88] sm:$0xff]
    %v158 = vld [vmem:[#allocation7 + $0x90] sm:$0xff]
    %v159 = vld [vmem:[#allocation7 + $0x98] sm:$0xff]
    %v160 = vld [vmem:[#allocation7 + $0xa0] sm:$0xff]
    %v161 = vld [vmem:[#allocation7 + $0xa8] sm:$0xff]
    %v162 = vld [vmem:[#allocation7 + $0xb0] sm:$0xff]
    %v163 = vld [vmem:[#allocation7 + $0xb8] sm:$0xff]
    %v164 = vld [vmem:[#allocation7 + $0xc0] sm:$0xff]
    %v165 = vld [vmem:[#allocation7 + $0xc8] sm:$0xff]
    %v166 = vld [vmem:[#allocation7 + $0xd0] sm:$0xff]
    %v167 = vld [vmem:[#allocation7 + $0xd8] sm:$0xff]
    %v168 = vld [vmem:[#allocation7 + $0xe0] sm:$0xff]
    %v169 = vld [vmem:[#allocation7 + $0xe8] sm:$0xff]
    %v170 = vld [vmem:[#allocation7 + $0xf0] sm:$0xff]
    %v171 = vld [vmem:[#allocation7 + $0xf8] sm:$0xff]
    %v172 = vld [vmem:[#allocation7 + $0x100] sm:$0xff]
    %v173 = vld [vmem:[#allocation7 + $0x108] sm:$0xff]
    %v174 = vld [vmem:[#allocation7 + $0x110] sm:$0xff]
    %v175 = vld [vmem:[#allocation7 + $0x118] sm:$0xff]
    %v176 = vld [vmem:[#allocation7 + $0x120] sm:$0xff]
    %v177 = vld [vmem:[#allocation7 + $0x128] sm:$0xff]
    %v178 = vld [vmem:[#allocation7 + $0x130] sm:$0xff]
    %v179 = vld [vmem:[#allocation7 + $0x138] sm:$0xff]
    %v180 = vld [vmem:[#allocation7 + $0x140] sm:$0xff]
    %v181 = vld [vmem:[#allocation7 + $0x148] sm:$0xff]
    %v182 = vld [vmem:[#allocation7 + $0x150] sm:$0xff]
    %v183 = vld [vmem:[#allocation7 + $0x158] sm:$0xff]
    %v184 = vld [vmem:[#allocation7 + $0x160] sm:$0xff]
    %v185 = vld [vmem:[#allocation7 + $0x168] sm:$0xff]
    %v186 = vld [vmem:[#allocation7 + $0x170] sm:$0xff]
    %v187 = vld [vmem:[#allocation7 + $0x178] sm:$0xff]
    %v188 = vld [vmem:[#allocation7 + $0x180] sm:$0xff]
    %v189 = vld [vmem:[#allocation7 + $0x188] sm:$0xff]
    %v190 = vld [vmem:[#allocation7 + $0x190] sm:$0xff]
    %v191 = vld [vmem:[#allocation7 + $0x198] sm:$0xff]
    %v192 = vld [vmem:[#allocation7 + $0x1a0] sm:$0xff]
    %v193 = vld [vmem:[#allocation7 + $0x1a8] sm:$0xff]
    %v194 = vld [vmem:[#allocation7 + $0x1b0] sm:$0xff]
    %v195 = vld [vmem:[#allocation7 + $0x1b8] sm:$0xff]
    %v196 = vld [vmem:[#allocation7 + $0x1c0] sm:$0xff]
    %v197 = vld [vmem:[#allocation7 + $0x1c8] sm:$0xff]
    %v198 = vld [vmem:[#allocation7 + $0x1d0] sm:$0xff]
    %v199 = vld [vmem:[#allocation7 + $0x1d8] sm:$0xff]
    %v200 = vld [vmem:[#allocation7 + $0x1e0] sm:$0xff]
    %v201 = vld [vmem:[#allocation7 + $0x1e8] sm:$0xff]
    %v202 = vld [vmem:[#allocation7 + $0x1f0] sm:$0xff]
    %v203 = vld [vmem:[#allocation7 + $0x1f8] sm:$0xff]
    %v204 = vld [vmem:[#allocation7 + $0x200] sm:$0xff]
    %v205 = vld [vmem:[#allocation7 + $0x208] sm:$0xff]
    %v206 = vld [vmem:[#allocation7 + $0x210] sm:$0xff]
    %v207 = vld [vmem:[#allocation7 + $0x218] sm:$0xff]
    %v208 = vld [vmem:[#allocation7 + $0x220] sm:$0xff]
    %v209 = vld [vmem:[#allocation7 + $0x228] sm:$0xff]
    %v210 = vld [vmem:[#allocation7 + $0x230] sm:$0xff]
    %v211 = vld [vmem:[#allocation7 + $0x238] sm:$0xff]
    %v212 = vld [vmem:[#allocation7 + $0x240] sm:$0xff]
    %v213 = vld [vmem:[#allocation7 + $0x248] sm:$0xff]
    %v214 = vld [vmem:[#allocation7 + $0x250] sm:$0xff]
    %v215 = vld [vmem:[#allocation7 + $0x258] sm:$0xff]
    %v216 = vld [vmem:[#allocation7 + $0x260] sm:$0xff]
    %v217 = vld [vmem:[#allocation7 + $0x268] sm:$0xff]
    %v218 = vld [vmem:[#allocation7 + $0x270] sm:$0xff]
    %v219 = vld [vmem:[#allocation7 + $0x278] sm:$0xff]
    %v220 = vld [vmem:[#allocation7 + $0x280] sm:$0xff]
    %v221 = vld [vmem:[#allocation7 + $0x288] sm:$0xff]
    %v222 = vld [vmem:[#allocation7 + $0x290] sm:$0xff]
    %v223 = vld [vmem:[#allocation7 + $0x298] sm:$0xff]
    %v224 = vld [vmem:[#allocation7 + $0x2a0] sm:$0xff]
    %v225 = vld [vmem:[#allocation7 + $0x2a8] sm:$0xff]
    %v226 = vld [vmem:[#allocation7 + $0x2b0] sm:$0xff]
    %v227 = vld [vmem:[#allocation7 + $0x2b8] sm:$0xff]
    %v228 = vld [vmem:[#allocation7 + $0x2c0] sm:$0xff]
    %v229 = vld [vmem:[#allocation7 + $0x2c8] sm:$0xff]
    %v230 = vld [vmem:[#allocation7 + $0x2d0] sm:$0xff]
    %v231 = vld [vmem:[#allocation7 + $0x2d8] sm:$0xff]
    %v232 = vld [vmem:[#allocation7 + $0x2e0] sm:$0xff]
    %v233 = vld [vmem:[#allocation7 + $0x2e8] sm:$0xff]
    %v234 = vld [vmem:[#allocation7 + $0x2f0] sm:$0xff]
    %v235 = vld [vmem:[#allocation7 + $0x2f8] sm:$0xff]
    %v236 = vld [vmem:[#allocation7 + $0x300] sm:$0xff]
    %v237 = vld [vmem:[#allocation7 + $0x308] sm:$0xff]
    %v238 = vld [vmem:[#allocation7 + $0x310] sm:$0xff]
    %v239 = vld [vmem:[#allocation7 + $0x318] sm:$0xff]
    %v240 = vld [vmem:[#allocation7 + $0x320] sm:$0xff]
    %v241 = vld [vmem:[#allocation7 + $0x328] sm:$0xff]
    %v242 = vld [vmem:[#allocation7 + $0x330] sm:$0xff]
    %v243 = vld [vmem:[#allocation7 + $0x338] sm:$0xff]
    %v244 = vld [vmem:[#allocation7 + $0x340] sm:$0xff]
    %v245 = vld [vmem:[#allocation7 + $0x348] sm:$0xff]
    %v246 = vld [vmem:[#allocation7 + $0x350] sm:$0xff]
    %v247 = vld [vmem:[#allocation7 + $0x358] sm:$0xff]
    %v248 = vld [vmem:[#allocation7 + $0x360] sm:$0xff]
    %v249 = vld [vmem:[#allocation7 + $0x368] sm:$0xff]
    %v250 = vld [vmem:[#allocation7 + $0x370] sm:$0xff]
    %v251 = vld [vmem:[#allocation7 + $0x378] sm:$0xff]
    %v252 = vld [vmem:[#allocation7 + $0x380] sm:$0xff]
    %v253 = vld [vmem:[#allocation7 + $0x388] sm:$0xff]
    %v254 = vld [vmem:[#allocation7 + $0x390] sm:$0xff]
    %v255 = vld [vmem:[#allocation7 + $0x398] sm:$0xff]
    %v256 = vld [vmem:[#allocation7 + $0x3a0] sm:$0xff]
    %v257 = vld [vmem:[#allocation7 + $0x3a8] sm:$0xff]
    %v258 = vld [vmem:[#allocation7 + $0x3b0] sm:$0xff]
    %v259 = vld [vmem:[#allocation7 + $0x3b8] sm:$0xff]
    %v260 = vld [vmem:[#allocation7 + $0x3c0] sm:$0xff]
    %v261 = vld [vmem:[#allocation7 + $0x3c8] sm:$0xff]
    %v262 = vld [vmem:[#allocation7 + $0x3d0] sm:$0xff]
    %v263 = vld [vmem:[#allocation7 + $0x3d8] sm:$0xff]
    %v264 = vld [vmem:[#allocation7 + $0x3e0] sm:$0xff]
    %v265 = vld [vmem:[#allocation7 + $0x3e8] sm:$0xff]
    %v266 = vld [vmem:[#allocation7 + $0x3f0] sm:$0xff]
    %v267 = vld [vmem:[#allocation7 + $0x3f8] sm:$0xff]
    %v268 = vld [vmem:[#allocation7 + $0x400] sm:$0xff]
    %v269 = vld [vmem:[#allocation7 + $0x408] sm:$0xff]
    %v270 = vld [vmem:[#allocation7 + $0x410] sm:$0xff]
    %v271 = vld [vmem:[#allocation7 + $0x418] sm:$0xff]
    %v272 = vld [vmem:[#allocation7 + $0x420] sm:$0xff]
    %v273 = vld [vmem:[#allocation7 + $0x428] sm:$0xff]
    %v274 = vld [vmem:[#allocation7 + $0x430] sm:$0xff]
    %v275 = vld [vmem:[#allocation7 + $0x438] sm:$0xff]
    %v276 = vld [vmem:[#allocation7 + $0x440] sm:$0xff]
    %v277 = vld [vmem:[#allocation7 + $0x448] sm:$0xff]
    %v278 = vld [vmem:[#allocation7 + $0x450] sm:$0xff]
    %v279 = vld [vmem:[#allocation7 + $0x458] sm:$0xff]
    %v280 = vld [vmem:[#allocation7 + $0x460] sm:$0xff]
    %v281 = vld [vmem:[#allocation7 + $0x468] sm:$0xff]
    %v282 = vld [vmem:[#allocation7 + $0x470] sm:$0xff]
    %v283 = vld [vmem:[#allocation7 + $0x478] sm:$0xff]
    %v284 = vld [vmem:[#allocation7 + $0x480] sm:$0xff]
    %v285 = vld [vmem:[#allocation7 + $0x488] sm:$0xff]
    %v286 = vld [vmem:[#allocation7 + $0x490] sm:$0xff]
    %v287 = vld [vmem:[#allocation7 + $0x498] sm:$0xff]
    %v288 = vld [vmem:[#allocation7 + $0x4a0] sm:$0xff]
    %v289 = vld [vmem:[#allocation7 + $0x4a8] sm:$0xff]
    %v290 = vld [vmem:[#allocation7 + $0x4b0] sm:$0xff]
    %v291 = vld [vmem:[#allocation7 + $0x4b8] sm:$0xff]
    %v292 = vld [vmem:[#allocation7 + $0x4c0] sm:$0xff]
    %v293 = vld [vmem:[#allocation7 + $0x4c8] sm:$0xff]
    %v294 = vld [vmem:[#allocation7 + $0x4d0] sm:$0xff]
    %v295 = vld [vmem:[#allocation7 + $0x4d8] sm:$0xff]
    %v296 = vld [vmem:[#allocation7 + $0x4e0] sm:$0xff]
    %v297 = vld [vmem:[#allocation7 + $0x4e8] sm:$0xff]
    %v298 = vld [vmem:[#allocation7 + $0x4f0] sm:$0xff]
    %v299 = vld [vmem:[#allocation7 + $0x4f8] sm:$0xff]
    %v300 = vld [vmem:[#allocation7 + $0x500] sm:$0xff]
    %v301 = vld [vmem:[#allocation7 + $0x508] sm:$0xff]
    %v302 = vld [vmem:[#allocation7 + $0x510] sm:$0xff]
    %v303 = vld [vmem:[#allocation7 + $0x518] sm:$0xff]
    %v304 = vld [vmem:[#allocation7 + $0x520] sm:$0xff]
    %v305 = vld [vmem:[#allocation7 + $0x528] sm:$0xff]
    %v306 = vld [vmem:[#allocation7 + $0x530] sm:$0xff]
    %v307 = vld [vmem:[#allocation7 + $0x538] sm:$0xff]
    %v308 = vld [vmem:[#allocation7 + $0x540] sm:$0xff]
    %v309 = vld [vmem:[#allocation7 + $0x548] sm:$0xff]
    %v310 = vld [vmem:[#allocation7 + $0x550] sm:$0xff]
    %v311 = vld [vmem:[#allocation7 + $0x558] sm:$0xff]
    %v312 = vld [vmem:[#allocation7 + $0x560] sm:$0xff]
    %v313 = vld [vmem:[#allocation7 + $0x568] sm:$0xff]
    %v314 = vld [vmem:[#allocation7 + $0x570] sm:$0xff]
    %v315 = vld [vmem:[#allocation7 + $0x578] sm:$0xff]
    %v316 = vld [vmem:[#allocation7 + $0x580] sm:$0xff]
    %v317 = vld [vmem:[#allocation7 + $0x588] sm:$0xff]
    %v318 = vld [vmem:[#allocation7 + $0x590] sm:$0xff]
    %v319 = vld [vmem:[#allocation7 + $0x598] sm:$0xff]
    %v320 = vld [vmem:[#allocation7 + $0x5a0] sm:$0xff]
    %v321 = vld [vmem:[#allocation7 + $0x5a8] sm:$0xff]
    %v322 = vld [vmem:[#allocation7 + $0x5b0] sm:$0xff]
    %v323 = vld [vmem:[#allocation7 + $0x5b8] sm:$0xff]
    %v324 = vld [vmem:[#allocation7 + $0x5c0] sm:$0xff]
    %v325 = vld [vmem:[#allocation7 + $0x5c8] sm:$0xff]
    %v326 = vld [vmem:[#allocation7 + $0x5d0] sm:$0xff]
    %v327 = vld [vmem:[#allocation7 + $0x5d8] sm:$0xff]
    %v328 = vld [vmem:[#allocation7 + $0x5e0] sm:$0xff]
    %v329 = vld [vmem:[#allocation7 + $0x5e8] sm:$0xff]
    %v330 = vld [vmem:[#allocation7 + $0x5f0] sm:$0xff]
    %v331 = vld [vmem:[#allocation7 + $0x5f8] sm:$0xff]
    %v332 = vld [vmem:[#allocation7 + $0x600] sm:$0xff]
    %v333 = vld [vmem:[#allocation7 + $0x608] sm:$0xff]
    %v334 = vld [vmem:[#allocation7 + $0x610] sm:$0xff]
    %v335 = vld [vmem:[#allocation7 + $0x618] sm:$0xff]
    %v336 = vld [vmem:[#allocation7 + $0x620] sm:$0xff]
    %v337 = vld [vmem:[#allocation7 + $0x628] sm:$0xff]
    %v338 = vld [vmem:[#allocation7 + $0x630] sm:$0xff]
    %v339 = vld [vmem:[#allocation7 + $0x638] sm:$0xff]
    %v340 = vld [vmem:[#allocation7 + $0x640] sm:$0xff]
    %v341 = vld [vmem:[#allocation7 + $0x648] sm:$0xff]
    %v342 = vld [vmem:[#allocation7 + $0x650] sm:$0xff]
    %v343 = vld [vmem:[#allocation7 + $0x658] sm:$0xff]
    %v344 = vld [vmem:[#allocation7 + $0x660] sm:$0xff]
    %v345 = vld [vmem:[#allocation7 + $0x668] sm:$0xff]
    %v346 = vld [vmem:[#allocation7 + $0x670] sm:$0xff]
    %v347 = vld [vmem:[#allocation7 + $0x678] sm:$0xff]
    %v348 = vld [vmem:[#allocation7 + $0x680] sm:$0xff]
    %v349 = vld [vmem:[#allocation7 + $0x688] sm:$0xff]
    %v350 = vld [vmem:[#allocation7 + $0x690] sm:$0xff]
    %v351 = vld [vmem:[#allocation7 + $0x698] sm:$0xff]
    %v352 = vld [vmem:[#allocation7 + $0x6a0] sm:$0xff]
    %v353 = vld [vmem:[#allocation7 + $0x6a8] sm:$0xff]
    %v354 = vld [vmem:[#allocation7 + $0x6b0] sm:$0xff]
    %v355 = vld [vmem:[#allocation7 + $0x6b8] sm:$0xff]
    %v356 = vld [vmem:[#allocation7 + $0x6c0] sm:$0xff]
    %v357 = vld [vmem:[#allocation7 + $0x6c8] sm:$0xff]
    %v358 = vld [vmem:[#allocation7 + $0x6d0] sm:$0xff]
    %v359 = vld [vmem:[#allocation7 + $0x6d8] sm:$0xff]
    %v360 = vld [vmem:[#allocation7 + $0x6e0] sm:$0xff]
    %v361 = vld [vmem:[#allocation7 + $0x6e8] sm:$0xff]
    %v362 = vld [vmem:[#allocation7 + $0x6f0] sm:$0xff]
    %v363 = vld [vmem:[#allocation7 + $0x6f8] sm:$0xff]
    %v588 = vunpack.c.l.b16 %v140
    %v589 = vunpack.c.h.b16 %v140
    %v590 = vunpack.c.l.b16 %v141
    %v591 = vunpack.c.h.b16 %v141
    %v592 = vunpack.c.l.b16 %v142
    %v593 = vunpack.c.h.b16 %v142
    %v594 = vunpack.c.l.b16 %v143
    %v595 = vunpack.c.h.b16 %v143
    %v596 = vunpack.c.l.b16 %v144
    %v597 = vunpack.c.h.b16 %v144
    %v598 = vunpack.c.l.b16 %v145
    %v599 = vunpack.c.h.b16 %v145
    %v600 = vunpack.c.l.b16 %v146
    %v601 = vunpack.c.h.b16 %v146
    %v602 = vunpack.c.l.b16 %v147
    %v603 = vunpack.c.h.b16 %v147
    %v604 = vunpack.c.l.b16 %v148
    %v605 = vunpack.c.h.b16 %v148
    %v606 = vunpack.c.l.b16 %v149
    %v607 = vunpack.c.h.b16 %v149
    %v608 = vunpack.c.l.b16 %v150
    %v609 = vunpack.c.h.b16 %v150
    %v610 = vunpack.c.l.b16 %v151
    %v611 = vunpack.c.h.b16 %v151
    %v612 = vunpack.c.l.b16 %v152
    %v613 = vunpack.c.h.b16 %v152
    %v614 = vunpack.c.l.b16 %v153
    %v615 = vunpack.c.h.b16 %v153
    %v616 = vunpack.c.l.b16 %v154
    %v617 = vunpack.c.h.b16 %v154
    %v618 = vunpack.c.l.b16 %v155
    %v619 = vunpack.c.h.b16 %v155
    %v620 = vunpack.c.l.b16 %v156
    %v621 = vunpack.c.h.b16 %v156
    %v622 = vunpack.c.l.b16 %v157
    %v623 = vunpack.c.h.b16 %v157
    %v624 = vunpack.c.l.b16 %v158
    %v625 = vunpack.c.h.b16 %v158
    %v626 = vunpack.c.l.b16 %v159
    %v627 = vunpack.c.h.b16 %v159
    %v628 = vunpack.c.l.b16 %v160
    %v629 = vunpack.c.h.b16 %v160
    %v630 = vunpack.c.l.b16 %v161
    %v631 = vunpack.c.h.b16 %v161
    %v632 = vunpack.c.l.b16 %v162
    %v633 = vunpack.c.h.b16 %v162
    %v634 = vunpack.c.l.b16 %v163
    %v635 = vunpack.c.h.b16 %v163
    %v636 = vunpack.c.l.b16 %v164
    %v637 = vunpack.c.h.b16 %v164
    %v638 = vunpack.c.l.b16 %v165
    %v639 = vunpack.c.h.b16 %v165
    %v640 = vunpack.c.l.b16 %v166
    %v641 = vunpack.c.h.b16 %v166
    %v642 = vunpack.c.l.b16 %v167
    %v643 = vunpack.c.h.b16 %v167
    %v644 = vunpack.c.l.b16 %v168
    %v645 = vunpack.c.h.b16 %v168
    %v646 = vunpack.c.l.b16 %v169
    %v647 = vunpack.c.h.b16 %v169
    %v648 = vunpack.c.l.b16 %v170
    %v649 = vunpack.c.h.b16 %v170
    %v650 = vunpack.c.l.b16 %v171
    %v651 = vunpack.c.h.b16 %v171
    %v652 = vunpack.c.l.b16 %v172
    %v653 = vunpack.c.h.b16 %v172
    %v654 = vunpack.c.l.b16 %v173
    %v655 = vunpack.c.h.b16 %v173
    %v656 = vunpack.c.l.b16 %v174
    %v657 = vunpack.c.h.b16 %v174
    %v658 = vunpack.c.l.b16 %v175
    %v659 = vunpack.c.h.b16 %v175
    %v660 = vunpack.c.l.b16 %v176
    %v661 = vunpack.c.h.b16 %v176
    %v662 = vunpack.c.l.b16 %v177
    %v663 = vunpack.c.h.b16 %v177
    %v664 = vunpack.c.l.b16 %v178
    %v665 = vunpack.c.h.b16 %v178
    %v666 = vunpack.c.l.b16 %v179
    %v667 = vunpack.c.h.b16 %v179
    %v668 = vunpack.c.l.b16 %v180
    %v669 = vunpack.c.h.b16 %v180
    %v670 = vunpack.c.l.b16 %v181
    %v671 = vunpack.c.h.b16 %v181
    %v672 = vunpack.c.l.b16 %v182
    %v673 = vunpack.c.h.b16 %v182
    %v674 = vunpack.c.l.b16 %v183
    %v675 = vunpack.c.h.b16 %v183
    %v676 = vunpack.c.l.b16 %v184
    %v677 = vunpack.c.h.b16 %v184
    %v678 = vunpack.c.l.b16 %v185
    %v679 = vunpack.c.h.b16 %v185
    %v680 = vunpack.c.l.b16 %v186
    %v681 = vunpack.c.h.b16 %v186
    %v682 = vunpack.c.l.b16 %v187
    %v683 = vunpack.c.h.b16 %v187
    %v684 = vunpack.c.l.b16 %v188
    %v685 = vunpack.c.h.b16 %v188
    %v686 = vunpack.c.l.b16 %v189
    %v687 = vunpack.c.h.b16 %v189
    %v688 = vunpack.c.l.b16 %v190
    %v689 = vunpack.c.h.b16 %v190
    %v690 = vunpack.c.l.b16 %v191
    %v691 = vunpack.c.h.b16 %v191
    %v692 = vunpack.c.l.b16 %v192
    %v693 = vunpack.c.h.b16 %v192
    %v694 = vunpack.c.l.b16 %v193
    %v695 = vunpack.c.h.b16 %v193
    %v696 = vunpack.c.l.b16 %v194
    %v697 = vunpack.c.h.b16 %v194
    %v698 = vunpack.c.l.b16 %v195
    %v699 = vunpack.c.h.b16 %v195
    %v700 = vunpack.c.l.b16 %v196
    %v701 = vunpack.c.h.b16 %v196
    %v702 = vunpack.c.l.b16 %v197
    %v703 = vunpack.c.h.b16 %v197
    %v704 = vunpack.c.l.b16 %v198
    %v705 = vunpack.c.h.b16 %v198
    %v706 = vunpack.c.l.b16 %v199
    %v707 = vunpack.c.h.b16 %v199
    %v708 = vunpack.c.l.b16 %v200
    %v709 = vunpack.c.h.b16 %v200
    %v710 = vunpack.c.l.b16 %v201
    %v711 = vunpack.c.h.b16 %v201
    %v712 = vunpack.c.l.b16 %v202
    %v713 = vunpack.c.h.b16 %v202
    %v714 = vunpack.c.l.b16 %v203
    %v715 = vunpack.c.h.b16 %v203
    %v716 = vunpack.c.l.b16 %v204
    %v717 = vunpack.c.h.b16 %v204
    %v718 = vunpack.c.l.b16 %v205
    %v719 = vunpack.c.h.b16 %v205
    %v720 = vunpack.c.l.b16 %v206
    %v721 = vunpack.c.h.b16 %v206
    %v722 = vunpack.c.l.b16 %v207
    %v723 = vunpack.c.h.b16 %v207
    %v724 = vunpack.c.l.b16 %v208
    %v725 = vunpack.c.h.b16 %v208
    %v726 = vunpack.c.l.b16 %v209
    %v727 = vunpack.c.h.b16 %v209
    %v728 = vunpack.c.l.b16 %v210
    %v729 = vunpack.c.h.b16 %v210
    %v730 = vunpack.c.l.b16 %v211
    %v731 = vunpack.c.h.b16 %v211
    %v732 = vunpack.c.l.b16 %v212
    %v733 = vunpack.c.h.b16 %v212
    %v734 = vunpack.c.l.b16 %v213
    %v735 = vunpack.c.h.b16 %v213
    %v736 = vunpack.c.l.b16 %v214
    %v737 = vunpack.c.h.b16 %v214
    %v738 = vunpack.c.l.b16 %v215
    %v739 = vunpack.c.h.b16 %v215
    %v740 = vunpack.c.l.b16 %v216
    %v741 = vunpack.c.h.b16 %v216
    %v742 = vunpack.c.l.b16 %v217
    %v743 = vunpack.c.h.b16 %v217
    %v744 = vunpack.c.l.b16 %v218
    %v745 = vunpack.c.h.b16 %v218
    %v746 = vunpack.c.l.b16 %v219
    %v747 = vunpack.c.h.b16 %v219
    %v748 = vunpack.c.l.b16 %v220
    %v749 = vunpack.c.h.b16 %v220
    %v750 = vunpack.c.l.b16 %v221
    %v751 = vunpack.c.h.b16 %v221
    %v752 = vunpack.c.l.b16 %v222
    %v753 = vunpack.c.h.b16 %v222
    %v754 = vunpack.c.l.b16 %v223
    %v755 = vunpack.c.h.b16 %v223
    %v756 = vunpack.c.l.b16 %v224
    %v757 = vunpack.c.h.b16 %v224
    %v758 = vunpack.c.l.b16 %v225
    %v759 = vunpack.c.h.b16 %v225
    %v760 = vunpack.c.l.b16 %v226
    %v761 = vunpack.c.h.b16 %v226
    %v762 = vunpack.c.l.b16 %v227
    %v763 = vunpack.c.h.b16 %v227
    %v764 = vunpack.c.l.b16 %v228
    %v765 = vunpack.c.h.b16 %v228
    %v766 = vunpack.c.l.b16 %v229
    %v767 = vunpack.c.h.b16 %v229
    %v768 = vunpack.c.l.b16 %v230
    %v769 = vunpack.c.h.b16 %v230
    %v770 = vunpack.c.l.b16 %v231
    %v771 = vunpack.c.h.b16 %v231
    %v772 = vunpack.c.l.b16 %v232
    %v773 = vunpack.c.h.b16 %v232
    %v774 = vunpack.c.l.b16 %v233
    %v775 = vunpack.c.h.b16 %v233
    %v776 = vunpack.c.l.b16 %v234
    %v777 = vunpack.c.h.b16 %v234
    %v778 = vunpack.c.l.b16 %v235
    %v779 = vunpack.c.h.b16 %v235
    %v780 = vunpack.c.l.b16 %v236
    %v781 = vunpack.c.h.b16 %v236
    %v782 = vunpack.c.l.b16 %v237
    %v783 = vunpack.c.h.b16 %v237
    %v784 = vunpack.c.l.b16 %v238
    %v785 = vunpack.c.h.b16 %v238
    %v786 = vunpack.c.l.b16 %v239
    %v787 = vunpack.c.h.b16 %v239
    %v788 = vunpack.c.l.b16 %v240
    %v789 = vunpack.c.h.b16 %v240
    %v790 = vunpack.c.l.b16 %v241
    %v791 = vunpack.c.h.b16 %v241
    %v792 = vunpack.c.l.b16 %v242
    %v793 = vunpack.c.h.b16 %v242
    %v794 = vunpack.c.l.b16 %v243
    %v795 = vunpack.c.h.b16 %v243
    %v796 = vunpack.c.l.b16 %v244
    %v797 = vunpack.c.h.b16 %v244
    %v798 = vunpack.c.l.b16 %v245
    %v799 = vunpack.c.h.b16 %v245
    %v800 = vunpack.c.l.b16 %v246
    %v801 = vunpack.c.h.b16 %v246
    %v802 = vunpack.c.l.b16 %v247
    %v803 = vunpack.c.h.b16 %v247
    %v804 = vunpack.c.l.b16 %v248
    %v805 = vunpack.c.h.b16 %v248
    %v806 = vunpack.c.l.b16 %v249
    %v807 = vunpack.c.h.b16 %v249
    %v808 = vunpack.c.l.b16 %v250
    %v809 = vunpack.c.h.b16 %v250
    %v810 = vunpack.c.l.b16 %v251
    %v811 = vunpack.c.h.b16 %v251
    %v812 = vunpack.c.l.b16 %v252
    %v813 = vunpack.c.h.b16 %v252
    %v814 = vunpack.c.l.b16 %v253
    %v815 = vunpack.c.h.b16 %v253
    %v816 = vunpack.c.l.b16 %v254
    %v817 = vunpack.c.h.b16 %v254
    %v818 = vunpack.c.l.b16 %v255
    %v819 = vunpack.c.h.b16 %v255
    %v820 = vunpack.c.l.b16 %v256
    %v821 = vunpack.c.h.b16 %v256
    %v822 = vunpack.c.l.b16 %v257
    %v823 = vunpack.c.h.b16 %v257
    %v824 = vunpack.c.l.b16 %v258
    %v825 = vunpack.c.h.b16 %v258
    %v826 = vunpack.c.l.b16 %v259
    %v827 = vunpack.c.h.b16 %v259
    %v828 = vunpack.c.l.b16 %v260
    %v829 = vunpack.c.h.b16 %v260
    %v830 = vunpack.c.l.b16 %v261
    %v831 = vunpack.c.h.b16 %v261
    %v832 = vunpack.c.l.b16 %v262
    %v833 = vunpack.c.h.b16 %v262
    %v834 = vunpack.c.l.b16 %v263
    %v835 = vunpack.c.h.b16 %v263
    %v836 = vunpack.c.l.b16 %v264
    %v837 = vunpack.c.h.b16 %v264
    %v838 = vunpack.c.l.b16 %v265
    %v839 = vunpack.c.h.b16 %v265
    %v840 = vunpack.c.l.b16 %v266
    %v841 = vunpack.c.h.b16 %v266
    %v842 = vunpack.c.l.b16 %v267
    %v843 = vunpack.c.h.b16 %v267
    %v844 = vunpack.c.l.b16 %v268
    %v845 = vunpack.c.h.b16 %v268
    %v846 = vunpack.c.l.b16 %v269
    %v847 = vunpack.c.h.b16 %v269
    %v848 = vunpack.c.l.b16 %v270
    %v849 = vunpack.c.h.b16 %v270
    %v850 = vunpack.c.l.b16 %v271
    %v851 = vunpack.c.h.b16 %v271
    %v852 = vunpack.c.l.b16 %v272
    %v853 = vunpack.c.h.b16 %v272
    %v854 = vunpack.c.l.b16 %v273
    %v855 = vunpack.c.h.b16 %v273
    %v856 = vunpack.c.l.b16 %v274
    %v857 = vunpack.c.h.b16 %v274
    %v858 = vunpack.c.l.b16 %v275
    %v859 = vunpack.c.h.b16 %v275
    %v860 = vunpack.c.l.b16 %v276
    %v861 = vunpack.c.h.b16 %v276
    %v862 = vunpack.c.l.b16 %v277
    %v863 = vunpack.c.h.b16 %v277
    %v864 = vunpack.c.l.b16 %v278
    %v865 = vunpack.c.h.b16 %v278
    %v866 = vunpack.c.l.b16 %v279
    %v867 = vunpack.c.h.b16 %v279
    %v868 = vunpack.c.l.b16 %v280
    %v869 = vunpack.c.h.b16 %v280
    %v870 = vunpack.c.l.b16 %v281
    %v871 = vunpack.c.h.b16 %v281
    %v872 = vunpack.c.l.b16 %v282
    %v873 = vunpack.c.h.b16 %v282
    %v874 = vunpack.c.l.b16 %v283
    %v875 = vunpack.c.h.b16 %v283
    %v876 = vunpack.c.l.b16 %v284
    %v877 = vunpack.c.h.b16 %v284
    %v878 = vunpack.c.l.b16 %v285
    %v879 = vunpack.c.h.b16 %v285
    %v880 = vunpack.c.l.b16 %v286
    %v881 = vunpack.c.h.b16 %v286
    %v882 = vunpack.c.l.b16 %v287
    %v883 = vunpack.c.h.b16 %v287
    %v884 = vunpack.c.l.b16 %v288
    %v885 = vunpack.c.h.b16 %v288
    %v886 = vunpack.c.l.b16 %v289
    %v887 = vunpack.c.h.b16 %v289
    %v888 = vunpack.c.l.b16 %v290
    %v889 = vunpack.c.h.b16 %v290
    %v890 = vunpack.c.l.b16 %v291
    %v891 = vunpack.c.h.b16 %v291
    %v892 = vunpack.c.l.b16 %v292
    %v893 = vunpack.c.h.b16 %v292
    %v894 = vunpack.c.l.b16 %v293
    %v895 = vunpack.c.h.b16 %v293
    %v896 = vunpack.c.l.b16 %v294
    %v897 = vunpack.c.h.b16 %v294
    %v898 = vunpack.c.l.b16 %v295
    %v899 = vunpack.c.h.b16 %v295
    %v900 = vunpack.c.l.b16 %v296
    %v901 = vunpack.c.h.b16 %v296
    %v902 = vunpack.c.l.b16 %v297
    %v903 = vunpack.c.h.b16 %v297
    %v904 = vunpack.c.l.b16 %v298
    %v905 = vunpack.c.h.b16 %v298
    %v906 = vunpack.c.l.b16 %v299
    %v907 = vunpack.c.h.b16 %v299
    %v908 = vunpack.c.l.b16 %v300
    %v909 = vunpack.c.h.b16 %v300
    %v910 = vunpack.c.l.b16 %v301
    %v911 = vunpack.c.h.b16 %v301
    %v912 = vunpack.c.l.b16 %v302
    %v913 = vunpack.c.h.b16 %v302
    %v914 = vunpack.c.l.b16 %v303
    %v915 = vunpack.c.h.b16 %v303
    %v916 = vunpack.c.l.b16 %v304
    %v917 = vunpack.c.h.b16 %v304
    %v918 = vunpack.c.l.b16 %v305
    %v919 = vunpack.c.h.b16 %v305
    %v920 = vunpack.c.l.b16 %v306
    %v921 = vunpack.c.h.b16 %v306
    %v922 = vunpack.c.l.b16 %v307
    %v923 = vunpack.c.h.b16 %v307
    %v924 = vunpack.c.l.b16 %v308
    %v925 = vunpack.c.h.b16 %v308
    %v926 = vunpack.c.l.b16 %v309
    %v927 = vunpack.c.h.b16 %v309
    %v928 = vunpack.c.l.b16 %v310
    %v929 = vunpack.c.h.b16 %v310
    %v930 = vunpack.c.l.b16 %v311
    %v931 = vunpack.c.h.b16 %v311
    %v932 = vunpack.c.l.b16 %v312
    %v933 = vunpack.c.h.b16 %v312
    %v934 = vunpack.c.l.b16 %v313
    %v935 = vunpack.c.h.b16 %v313
    %v936 = vunpack.c.l.b16 %v314
    %v937 = vunpack.c.h.b16 %v314
    %v938 = vunpack.c.l.b16 %v315
    %v939 = vunpack.c.h.b16 %v315
    %v940 = vunpack.c.l.b16 %v316
    %v941 = vunpack.c.h.b16 %v316
    %v942 = vunpack.c.l.b16 %v317
    %v943 = vunpack.c.h.b16 %v317
    %v944 = vunpack.c.l.b16 %v318
    %v945 = vunpack.c.h.b16 %v318
    %v946 = vunpack.c.l.b16 %v319
    %v947 = vunpack.c.h.b16 %v319
    %v948 = vunpack.c.l.b16 %v320
    %v949 = vunpack.c.h.b16 %v320
    %v950 = vunpack.c.l.b16 %v321
    %v951 = vunpack.c.h.b16 %v321
    %v952 = vunpack.c.l.b16 %v322
    %v953 = vunpack.c.h.b16 %v322
    %v954 = vunpack.c.l.b16 %v323
    %v955 = vunpack.c.h.b16 %v323
    %v956 = vunpack.c.l.b16 %v324
    %v957 = vunpack.c.h.b16 %v324
    %v958 = vunpack.c.l.b16 %v325
    %v959 = vunpack.c.h.b16 %v325
    %v960 = vunpack.c.l.b16 %v326
    %v961 = vunpack.c.h.b16 %v326
    %v962 = vunpack.c.l.b16 %v327
    %v963 = vunpack.c.h.b16 %v327
    %v964 = vunpack.c.l.b16 %v328
    %v965 = vunpack.c.h.b16 %v328
    %v966 = vunpack.c.l.b16 %v329
    %v967 = vunpack.c.h.b16 %v329
    %v968 = vunpack.c.l.b16 %v330
    %v969 = vunpack.c.h.b16 %v330
    %v970 = vunpack.c.l.b16 %v331
    %v971 = vunpack.c.h.b16 %v331
    %v972 = vunpack.c.l.b16 %v332
    %v973 = vunpack.c.h.b16 %v332
    %v974 = vunpack.c.l.b16 %v333
    %v975 = vunpack.c.h.b16 %v333
    %v976 = vunpack.c.l.b16 %v334
    %v977 = vunpack.c.h.b16 %v334
    %v978 = vunpack.c.l.b16 %v335
    %v979 = vunpack.c.h.b16 %v335
    %v980 = vunpack.c.l.b16 %v336
    %v981 = vunpack.c.h.b16 %v336
    %v982 = vunpack.c.l.b16 %v337
    %v983 = vunpack.c.h.b16 %v337
    %v984 = vunpack.c.l.b16 %v338
    %v985 = vunpack.c.h.b16 %v338
    %v986 = vunpack.c.l.b16 %v339
    %v987 = vunpack.c.h.b16 %v339
    %v988 = vunpack.c.l.b16 %v340
    %v989 = vunpack.c.h.b16 %v340
    %v990 = vunpack.c.l.b16 %v341
    %v991 = vunpack.c.h.b16 %v341
    %v992 = vunpack.c.l.b16 %v342
    %v993 = vunpack.c.h.b16 %v342
    %v994 = vunpack.c.l.b16 %v343
    %v995 = vunpack.c.h.b16 %v343
    %v996 = vunpack.c.l.b16 %v344
    %v997 = vunpack.c.h.b16 %v344
    %v998 = vunpack.c.l.b16 %v345
    %v999 = vunpack.c.h.b16 %v345
    %v1000 = vunpack.c.l.b16 %v346
    %v1001 = vunpack.c.h.b16 %v346
    %v1002 = vunpack.c.l.b16 %v347
    %v1003 = vunpack.c.h.b16 %v347
    %v1004 = vunpack.c.l.b16 %v348
    %v1005 = vunpack.c.h.b16 %v348
    %v1006 = vunpack.c.l.b16 %v349
    %v1007 = vunpack.c.h.b16 %v349
    %v1008 = vunpack.c.l.b16 %v350
    %v1009 = vunpack.c.h.b16 %v350
    %v1010 = vunpack.c.l.b16 %v351
    %v1011 = vunpack.c.h.b16 %v351
    %v1012 = vunpack.c.l.b16 %v352
    %v1013 = vunpack.c.h.b16 %v352
    %v1014 = vunpack.c.l.b16 %v353
    %v1015 = vunpack.c.h.b16 %v353
    %v1016 = vunpack.c.l.b16 %v354
    %v1017 = vunpack.c.h.b16 %v354
    %v1018 = vunpack.c.l.b16 %v355
    %v1019 = vunpack.c.h.b16 %v355
    %v1020 = vunpack.c.l.b16 %v356
    %v1021 = vunpack.c.h.b16 %v356
    %v1022 = vunpack.c.l.b16 %v357
    %v1023 = vunpack.c.h.b16 %v357
    %v1024 = vunpack.c.l.b16 %v358
    %v1025 = vunpack.c.h.b16 %v358
    %v1026 = vunpack.c.l.b16 %v359
    %v1027 = vunpack.c.h.b16 %v359
    %v1028 = vunpack.c.l.b16 %v360
    %v1029 = vunpack.c.h.b16 %v360
    %v1030 = vunpack.c.l.b16 %v361
    %v1031 = vunpack.c.h.b16 %v361
    %v1032 = vunpack.c.l.b16 %v362
    %v1033 = vunpack.c.h.b16 %v362
    %v1034 = vunpack.c.l.b16 %v363
    %v1035 = vunpack.c.h.b16 %v363
    %v1036 = vpack.c.b16 %v592, %v588
    %v1037 = vpack.c.b16 %v593, %v589
    %v1038 = vpack.c.b16 %v594, %v590
    %v1039 = vpack.c.b16 %v595, %v591
    %v1040 = vpack.c.b16 %v600, %v596
    %v1041 = vpack.c.b16 %v601, %v597
    %v1042 = vpack.c.b16 %v602, %v598
    %v1043 = vpack.c.b16 %v603, %v599
    %v1044 = vpack.c.b16 %v608, %v604
    %v1045 = vpack.c.b16 %v609, %v605
    %v1046 = vpack.c.b16 %v610, %v606
    %v1047 = vpack.c.b16 %v611, %v607
    %v1048 = vpack.c.b16 %v616, %v612
    %v1049 = vpack.c.b16 %v617, %v613
    %v1050 = vpack.c.b16 %v618, %v614
    %v1051 = vpack.c.b16 %v619, %v615
    %v1052 = vpack.c.b16 %v624, %v620
    %v1053 = vpack.c.b16 %v625, %v621
    %v1054 = vpack.c.b16 %v626, %v622
    %v1055 = vpack.c.b16 %v627, %v623
    %v1056 = vpack.c.b16 %v632, %v628
    %v1057 = vpack.c.b16 %v633, %v629
    %v1058 = vpack.c.b16 %v634, %v630
    %v1059 = vpack.c.b16 %v635, %v631
    %v1060 = vpack.c.b16 %v640, %v636
    %v1061 = vpack.c.b16 %v641, %v637
    %v1062 = vpack.c.b16 %v642, %v638
    %v1063 = vpack.c.b16 %v643, %v639
    %v1064 = vpack.c.b16 %v648, %v644
    %v1065 = vpack.c.b16 %v649, %v645
    %v1066 = vpack.c.b16 %v650, %v646
    %v1067 = vpack.c.b16 %v651, %v647
    %v1068 = vpack.c.b16 %v656, %v652
    %v1069 = vpack.c.b16 %v657, %v653
    %v1070 = vpack.c.b16 %v658, %v654
    %v1071 = vpack.c.b16 %v659, %v655
    %v1072 = vpack.c.b16 %v664, %v660
    %v1073 = vpack.c.b16 %v665, %v661
    %v1074 = vpack.c.b16 %v666, %v662
    %v1075 = vpack.c.b16 %v667, %v663
    %v1076 = vpack.c.b16 %v672, %v668
    %v1077 = vpack.c.b16 %v673, %v669
    %v1078 = vpack.c.b16 %v674, %v670
    %v1079 = vpack.c.b16 %v675, %v671
    %v1080 = vpack.c.b16 %v680, %v676
    %v1081 = vpack.c.b16 %v681, %v677
    %v1082 = vpack.c.b16 %v682, %v678
    %v1083 = vpack.c.b16 %v683, %v679
    %v1084 = vpack.c.b16 %v688, %v684
    %v1085 = vpack.c.b16 %v689, %v685
    %v1086 = vpack.c.b16 %v690, %v686
    %v1087 = vpack.c.b16 %v691, %v687
    %v1088 = vpack.c.b16 %v696, %v692
    %v1089 = vpack.c.b16 %v697, %v693
    %v1090 = vpack.c.b16 %v698, %v694
    %v1091 = vpack.c.b16 %v699, %v695
    %v1092 = vpack.c.b16 %v704, %v700
    %v1093 = vpack.c.b16 %v705, %v701
    %v1094 = vpack.c.b16 %v706, %v702
    %v1095 = vpack.c.b16 %v707, %v703
    %v1096 = vpack.c.b16 %v712, %v708
    %v1097 = vpack.c.b16 %v713, %v709
    %v1098 = vpack.c.b16 %v714, %v710
    %v1099 = vpack.c.b16 %v715, %v711
    %v1100 = vpack.c.b16 %v720, %v716
    %v1101 = vpack.c.b16 %v721, %v717
    %v1102 = vpack.c.b16 %v722, %v718
    %v1103 = vpack.c.b16 %v723, %v719
    %v1104 = vpack.c.b16 %v728, %v724
    %v1105 = vpack.c.b16 %v729, %v725
    %v1106 = vpack.c.b16 %v730, %v726
    %v1107 = vpack.c.b16 %v731, %v727
    %v1108 = vpack.c.b16 %v736, %v732
    %v1109 = vpack.c.b16 %v737, %v733
    %v1110 = vpack.c.b16 %v738, %v734
    %v1111 = vpack.c.b16 %v739, %v735
    %v1112 = vpack.c.b16 %v744, %v740
    %v1113 = vpack.c.b16 %v745, %v741
    %v1114 = vpack.c.b16 %v746, %v742
    %v1115 = vpack.c.b16 %v747, %v743
    %v1116 = vpack.c.b16 %v752, %v748
    %v1117 = vpack.c.b16 %v753, %v749
    %v1118 = vpack.c.b16 %v754, %v750
    %v1119 = vpack.c.b16 %v755, %v751
    %v1120 = vpack.c.b16 %v760, %v756
    %v1121 = vpack.c.b16 %v761, %v757
    %v1122 = vpack.c.b16 %v762, %v758
    %v1123 = vpack.c.b16 %v763, %v759
    %v1124 = vpack.c.b16 %v768, %v764
    %v1125 = vpack.c.b16 %v769, %v765
    %v1126 = vpack.c.b16 %v770, %v766
    %v1127 = vpack.c.b16 %v771, %v767
    %v1128 = vpack.c.b16 %v776, %v772
    %v1129 = vpack.c.b16 %v777, %v773
    %v1130 = vpack.c.b16 %v778, %v774
    %v1131 = vpack.c.b16 %v779, %v775
    %v1132 = vpack.c.b16 %v784, %v780
    %v1133 = vpack.c.b16 %v785, %v781
    %v1134 = vpack.c.b16 %v786, %v782
    %v1135 = vpack.c.b16 %v787, %v783
    %v1136 = vpack.c.b16 %v792, %v788
    %v1137 = vpack.c.b16 %v793, %v789
    %v1138 = vpack.c.b16 %v794, %v790
    %v1139 = vpack.c.b16 %v795, %v791
    %v1140 = vpack.c.b16 %v800, %v796
    %v1141 = vpack.c.b16 %v801, %v797
    %v1142 = vpack.c.b16 %v802, %v798
    %v1143 = vpack.c.b16 %v803, %v799
    %v1144 = vpack.c.b16 %v808, %v804
    %v1145 = vpack.c.b16 %v809, %v805
    %v1146 = vpack.c.b16 %v810, %v806
    %v1147 = vpack.c.b16 %v811, %v807
    %v1148 = vpack.c.b16 %v816, %v812
    %v1149 = vpack.c.b16 %v817, %v813
    %v1150 = vpack.c.b16 %v818, %v814
    %v1151 = vpack.c.b16 %v819, %v815
    %v1152 = vpack.c.b16 %v824, %v820
    %v1153 = vpack.c.b16 %v825, %v821
    %v1154 = vpack.c.b16 %v826, %v822
    %v1155 = vpack.c.b16 %v827, %v823
    %v1156 = vpack.c.b16 %v832, %v828
    %v1157 = vpack.c.b16 %v833, %v829
    %v1158 = vpack.c.b16 %v834, %v830
    %v1159 = vpack.c.b16 %v835, %v831
    %v1160 = vpack.c.b16 %v840, %v836
    %v1161 = vpack.c.b16 %v841, %v837
    %v1162 = vpack.c.b16 %v842, %v838
    %v1163 = vpack.c.b16 %v843, %v839
    %v1164 = vpack.c.b16 %v848, %v844
    %v1165 = vpack.c.b16 %v849, %v845
    %v1166 = vpack.c.b16 %v850, %v846
    %v1167 = vpack.c.b16 %v851, %v847
    %v1168 = vpack.c.b16 %v856, %v852
    %v1169 = vpack.c.b16 %v857, %v853
    %v1170 = vpack.c.b16 %v858, %v854
    %v1171 = vpack.c.b16 %v859, %v855
    %v1172 = vpack.c.b16 %v864, %v860
    %v1173 = vpack.c.b16 %v865, %v861
    %v1174 = vpack.c.b16 %v866, %v862
    %v1175 = vpack.c.b16 %v867, %v863
    %v1176 = vpack.c.b16 %v872, %v868
    %v1177 = vpack.c.b16 %v873, %v869
    %v1178 = vpack.c.b16 %v874, %v870
    %v1179 = vpack.c.b16 %v875, %v871
    %v1180 = vpack.c.b16 %v880, %v876
    %v1181 = vpack.c.b16 %v881, %v877
    %v1182 = vpack.c.b16 %v882, %v878
    %v1183 = vpack.c.b16 %v883, %v879
    %v1184 = vpack.c.b16 %v888, %v884
    %v1185 = vpack.c.b16 %v889, %v885
    %v1186 = vpack.c.b16 %v890, %v886
    %v1187 = vpack.c.b16 %v891, %v887
    %v1188 = vpack.c.b16 %v896, %v892
    %v1189 = vpack.c.b16 %v897, %v893
    %v1190 = vpack.c.b16 %v898, %v894
    %v1191 = vpack.c.b16 %v899, %v895
    %v1192 = vpack.c.b16 %v904, %v900
    %v1193 = vpack.c.b16 %v905, %v901
    %v1194 = vpack.c.b16 %v906, %v902
    %v1195 = vpack.c.b16 %v907, %v903
    %v1196 = vpack.c.b16 %v912, %v908
    %v1197 = vpack.c.b16 %v913, %v909
    %v1198 = vpack.c.b16 %v914, %v910
    %v1199 = vpack.c.b16 %v915, %v911
    %v1200 = vpack.c.b16 %v920, %v916
    %v1201 = vpack.c.b16 %v921, %v917
    %v1202 = vpack.c.b16 %v922, %v918
    %v1203 = vpack.c.b16 %v923, %v919
    %v1204 = vpack.c.b16 %v928, %v924
    %v1205 = vpack.c.b16 %v929, %v925
    %v1206 = vpack.c.b16 %v930, %v926
    %v1207 = vpack.c.b16 %v931, %v927
    %v1208 = vpack.c.b16 %v936, %v932
    %v1209 = vpack.c.b16 %v937, %v933
    %v1210 = vpack.c.b16 %v938, %v934
    %v1211 = vpack.c.b16 %v939, %v935
    %v1212 = vpack.c.b16 %v944, %v940
    %v1213 = vpack.c.b16 %v945, %v941
    %v1214 = vpack.c.b16 %v946, %v942
    %v1215 = vpack.c.b16 %v947, %v943
    %v1216 = vpack.c.b16 %v952, %v948
    %v1217 = vpack.c.b16 %v953, %v949
    %v1218 = vpack.c.b16 %v954, %v950
    %v1219 = vpack.c.b16 %v955, %v951
    %v1220 = vpack.c.b16 %v960, %v956
    %v1221 = vpack.c.b16 %v961, %v957
    %v1222 = vpack.c.b16 %v962, %v958
    %v1223 = vpack.c.b16 %v963, %v959
    %v1224 = vpack.c.b16 %v968, %v964
    %v1225 = vpack.c.b16 %v969, %v965
    %v1226 = vpack.c.b16 %v970, %v966
    %v1227 = vpack.c.b16 %v971, %v967
    %v1228 = vpack.c.b16 %v976, %v972
    %v1229 = vpack.c.b16 %v977, %v973
    %v1230 = vpack.c.b16 %v978, %v974
    %v1231 = vpack.c.b16 %v979, %v975
    %v1232 = vpack.c.b16 %v984, %v980
    %v1233 = vpack.c.b16 %v985, %v981
    %v1234 = vpack.c.b16 %v986, %v982
    %v1235 = vpack.c.b16 %v987, %v983
    %v1236 = vpack.c.b16 %v992, %v988
    %v1237 = vpack.c.b16 %v993, %v989
    %v1238 = vpack.c.b16 %v994, %v990
    %v1239 = vpack.c.b16 %v995, %v991
    %v1240 = vpack.c.b16 %v1000, %v996
    %v1241 = vpack.c.b16 %v1001, %v997
    %v1242 = vpack.c.b16 %v1002, %v998
    %v1243 = vpack.c.b16 %v1003, %v999
    %v1244 = vpack.c.b16 %v1008, %v1004
    %v1245 = vpack.c.b16 %v1009, %v1005
    %v1246 = vpack.c.b16 %v1010, %v1006
    %v1247 = vpack.c.b16 %v1011, %v1007
    %v1248 = vpack.c.b16 %v1016, %v1012
    %v1249 = vpack.c.b16 %v1017, %v1013
    %v1250 = vpack.c.b16 %v1018, %v1014
    %v1251 = vpack.c.b16 %v1019, %v1015
    %v1252 = vpack.c.b16 %v1024, %v1020
    %v1253 = vpack.c.b16 %v1025, %v1021
    %v1254 = vpack.c.b16 %v1026, %v1022
    %v1255 = vpack.c.b16 %v1027, %v1023
    %v1256 = vpack.c.b16 %v1032, %v1028
    %v1257 = vpack.c.b16 %v1033, %v1029
    %v1258 = vpack.c.b16 %v1034, %v1030
    %v1259 = vpack.c.b16 %v1035, %v1031
    %1484 = vmatpush.bf16.msra.mxu0 %v1064
    %1485 = vmatpush.bf16.msra.mxu0 %v1060
    %1486 = vmatpush.bf16.msra.mxu0 %v1056
    %1487 = vmatpush.bf16.msra.mxu0 %v1052
    %1488 = vmatpush.bf16.msra.mxu0 %v1048
    %1489 = vmatpush.bf16.msra.mxu0 %v1044
    %1490 = vmatpush.bf16.msra.mxu0 %v1040
    %1491 = vmatpush.bf16.msra.mxu0 %v1036
    %1492 = vmatmul.bf16.gmra.mxu0 %v133
    %v1493 = vpop.f32.mrf.mxu0
    %v1494 = vadd.f32 0.0, %v1493
    %v1495 = vpop.f32.mrf.mxu0
    %v1496 = vadd.f32 0.0, %v1495
    %1497 = vdwg.mxu0
    %1498 = vmatpush.bf16.msra.mxu0 %v1096
    %1499 = vmatpush.bf16.msra.mxu0 %v1092
    %1500 = vmatpush.bf16.msra.mxu0 %v1088
    %1501 = vmatpush.bf16.msra.mxu0 %v1084
    %1502 = vmatpush.bf16.msra.mxu0 %v1080
    %1503 = vmatpush.bf16.msra.mxu0 %v1076
    %1504 = vmatpush.bf16.msra.mxu0 %v1072
    %1505 = vmatpush.bf16.msra.mxu0 %v1068
    %1506 = vmatmul.bf16.gmra.mxu0 %v134
    %v1507 = vpop.f32.mrf.mxu0
    %v1508 = vadd.f32 %v1494, %v1507
    %v1509 = vpop.f32.mrf.mxu0
    %v1510 = vadd.f32 %v1496, %v1509
    %1511 = vdwg.mxu0
    %1512 = vmatpush.bf16.msra.mxu0 %v1128
    %1513 = vmatpush.bf16.msra.mxu0 %v1124
    %1514 = vmatpush.bf16.msra.mxu0 %v1120
    %1515 = vmatpush.bf16.msra.mxu0 %v1116
    %1516 = vmatpush.bf16.msra.mxu0 %v1112
    %1517 = vmatpush.bf16.msra.mxu0 %v1108
    %1518 = vmatpush.bf16.msra.mxu0 %v1104
    %1519 = vmatpush.bf16.msra.mxu0 %v1100
    %1520 = vmatmul.bf16.gmra.mxu0 %v135
    %v1521 = vpop.f32.mrf.mxu0
    %v1522 = vadd.f32 %v1508, %v1521
    %v1523 = vpop.f32.mrf.mxu0
    %v1524 = vadd.f32 %v1510, %v1523
    %1525 = vdwg.mxu0
    %1526 = vmatpush.bf16.msra.mxu0 %v1160
    %1527 = vmatpush.bf16.msra.mxu0 %v1156
    %1528 = vmatpush.bf16.msra.mxu0 %v1152
    %1529 = vmatpush.bf16.msra.mxu0 %v1148
    %1530 = vmatpush.bf16.msra.mxu0 %v1144
    %1531 = vmatpush.bf16.msra.mxu0 %v1140
    %1532 = vmatpush.bf16.msra.mxu0 %v1136
    %1533 = vmatpush.bf16.msra.mxu0 %v1132
    %1534 = vmatmul.bf16.gmra.mxu0 %v136
    %v1535 = vpop.f32.mrf.mxu0
    %v1536 = vadd.f32 %v1522, %v1535
    %v1537 = vpop.f32.mrf.mxu0
    %v1538 = vadd.f32 %v1524, %v1537
    %1539 = vdwg.mxu0
    %1540 = vmatpush.bf16.msra.mxu0 %v1192
    %1541 = vmatpush.bf16.msra.mxu0 %v1188
    %1542 = vmatpush.bf16.msra.mxu0 %v1184
    %1543 = vmatpush.bf16.msra.mxu0 %v1180
    %1544 = vmatpush.bf16.msra.mxu0 %v1176
    %1545 = vmatpush.bf16.msra.mxu0 %v1172
    %1546 = vmatpush.bf16.msra.mxu0 %v1168
    %1547 = vmatpush.bf16.msra.mxu0 %v1164
    %1548 = vmatmul.bf16.gmra.mxu0 %v137
    %v1549 = vpop.f32.mrf.mxu0
    %v1550 = vadd.f32 %v1536, %v1549
    %v1551 = vpop.f32.mrf.mxu0
    %v1552 = vadd.f32 %v1538, %v1551
    %1553 = vdwg.mxu0
    %1554 = vmatpush.bf16.msra.mxu0 %v1224
    %1555 = vmatpush.bf16.msra.mxu0 %v1220
    %1556 = vmatpush.bf16.msra.mxu0 %v1216
    %1557 = vmatpush.bf16.msra.mxu0 %v1212
    %1558 = vmatpush.bf16.msra.mxu0 %v1208
    %1559 = vmatpush.bf16.msra.mxu0 %v1204
    %1560 = vmatpush.bf16.msra.mxu0 %v1200
    %1561 = vmatpush.bf16.msra.mxu0 %v1196
    %1562 = vmatmul.bf16.gmra.mxu0 %v138
    %v1563 = vpop.f32.mrf.mxu0
    %v1564 = vadd.f32 %v1550, %v1563
    %v1565 = vpop.f32.mrf.mxu0
    %v1566 = vadd.f32 %v1552, %v1565
    %1567 = vdwg.mxu0
    %1568 = vmatpush.bf16.msra.mxu0 %v1256
    %1569 = vmatpush.bf16.msra.mxu0 %v1252
    %1570 = vmatpush.bf16.msra.mxu0 %v1248
    %1571 = vmatpush.bf16.msra.mxu0 %v1244
    %1572 = vmatpush.bf16.msra.mxu0 %v1240
    %1573 = vmatpush.bf16.msra.mxu0 %v1236
    %1574 = vmatpush.bf16.msra.mxu0 %v1232
    %1575 = vmatpush.bf16.msra.mxu0 %v1228
    %1576 = vmatmul.bf16.gmra.mxu0 %v139
    %v1577 = vpop.f32.mrf.mxu0
    %v1578 = vadd.f32 %v1564, %v1577
    %v1579 = vpop.f32.mrf.mxu0
    %v1580 = vadd.f32 %v1566, %v1579
    %1581 = vdwg.mxu0
    %1582 = vmatpush.bf16.msra.mxu0 %v1065
    %1583 = vmatpush.bf16.msra.mxu0 %v1061
    %1584 = vmatpush.bf16.msra.mxu0 %v1057
    %1585 = vmatpush.bf16.msra.mxu0 %v1053
    %1586 = vmatpush.bf16.msra.mxu0 %v1049
    %1587 = vmatpush.bf16.msra.mxu0 %v1045
    %1588 = vmatpush.bf16.msra.mxu0 %v1041
    %1589 = vmatpush.bf16.msra.mxu0 %v1037
    %1590 = vmatmul.bf16.gmra.mxu0 %v133
    %v1591 = vpop.f32.mrf.mxu0
    %v1592 = vadd.f32 0.0, %v1591
    %v1593 = vpop.f32.mrf.mxu0
    %v1594 = vadd.f32 0.0, %v1593
    %1595 = vdwg.mxu0
    %1596 = vmatpush.bf16.msra.mxu0 %v1097
    %1597 = vmatpush.bf16.msra.mxu0 %v1093
    %1598 = vmatpush.bf16.msra.mxu0 %v1089
    %1599 = vmatpush.bf16.msra.mxu0 %v1085
    %1600 = vmatpush.bf16.msra.mxu0 %v1081
    %1601 = vmatpush.bf16.msra.mxu0 %v1077
    %1602 = vmatpush.bf16.msra.mxu0 %v1073
    %1603 = vmatpush.bf16.msra.mxu0 %v1069
    %1604 = vmatmul.bf16.gmra.mxu0 %v134
    %v1605 = vpop.f32.mrf.mxu0
    %v1606 = vadd.f32 %v1592, %v1605
    %v1607 = vpop.f32.mrf.mxu0
    %v1608 = vadd.f32 %v1594, %v1607
    %1609 = vdwg.mxu0
    %1610 = vmatpush.bf16.msra.mxu0 %v1129
    %1611 = vmatpush.bf16.msra.mxu0 %v1125
    %1612 = vmatpush.bf16.msra.mxu0 %v1121
    %1613 = vmatpush.bf16.msra.mxu0 %v1117
    %1614 = vmatpush.bf16.msra.mxu0 %v1113
    %1615 = vmatpush.bf16.msra.mxu0 %v1109
    %1616 = vmatpush.bf16.msra.mxu0 %v1105
    %1617 = vmatpush.bf16.msra.mxu0 %v1101
    %1618 = vmatmul.bf16.gmra.mxu0 %v135
    %v1619 = vpop.f32.mrf.mxu0
    %v1620 = vadd.f32 %v1606, %v1619
    %v1621 = vpop.f32.mrf.mxu0
    %v1622 = vadd.f32 %v1608, %v1621
    %1623 = vdwg.mxu0
    %1624 = vmatpush.bf16.msra.mxu0 %v1161
    %1625 = vmatpush.bf16.msra.mxu0 %v1157
    %1626 = vmatpush.bf16.msra.mxu0 %v1153
    %1627 = vmatpush.bf16.msra.mxu0 %v1149
    %1628 = vmatpush.bf16.msra.mxu0 %v1145
    %1629 = vmatpush.bf16.msra.mxu0 %v1141
    %1630 = vmatpush.bf16.msra.mxu0 %v1137
    %1631 = vmatpush.bf16.msra.mxu0 %v1133
    %1632 = vmatmul.bf16.gmra.mxu0 %v136
    %v1633 = vpop.f32.mrf.mxu0
    %v1634 = vadd.f32 %v1620, %v1633
    %v1635 = vpop.f32.mrf.mxu0
    %v1636 = vadd.f32 %v1622, %v1635
    %1637 = vdwg.mxu0
    %1638 = vmatpush.bf16.msra.mxu0 %v1193
    %1639 = vmatpush.bf16.msra.mxu0 %v1189
    %1640 = vmatpush.bf16.msra.mxu0 %v1185
    %1641 = vmatpush.bf16.msra.mxu0 %v1181
    %1642 = vmatpush.bf16.msra.mxu0 %v1177
    %1643 = vmatpush.bf16.msra.mxu0 %v1173
    %1644 = vmatpush.bf16.msra.mxu0 %v1169
    %1645 = vmatpush.bf16.msra.mxu0 %v1165
    %1646 = vmatmul.bf16.gmra.mxu0 %v137
    %v1647 = vpop.f32.mrf.mxu0
    %v1648 = vadd.f32 %v1634, %v1647
    %v1649 = vpop.f32.mrf.mxu0
    %v1650 = vadd.f32 %v1636, %v1649
    %1651 = vdwg.mxu0
    %1652 = vmatpush.bf16.msra.mxu0 %v1225
    %1653 = vmatpush.bf16.msra.mxu0 %v1221
    %1654 = vmatpush.bf16.msra.mxu0 %v1217
    %1655 = vmatpush.bf16.msra.mxu0 %v1213
    %1656 = vmatpush.bf16.msra.mxu0 %v1209
    %1657 = vmatpush.bf16.msra.mxu0 %v1205
    %1658 = vmatpush.bf16.msra.mxu0 %v1201
    %1659 = vmatpush.bf16.msra.mxu0 %v1197
    %1660 = vmatmul.bf16.gmra.mxu0 %v138
    %v1661 = vpop.f32.mrf.mxu0
    %v1662 = vadd.f32 %v1648, %v1661
    %v1663 = vpop.f32.mrf.mxu0
    %v1664 = vadd.f32 %v1650, %v1663
    %1665 = vdwg.mxu0
    %1666 = vmatpush.bf16.msra.mxu0 %v1257
    %1667 = vmatpush.bf16.msra.mxu0 %v1253
    %1668 = vmatpush.bf16.msra.mxu0 %v1249
    %1669 = vmatpush.bf16.msra.mxu0 %v1245
    %1670 = vmatpush.bf16.msra.mxu0 %v1241
    %1671 = vmatpush.bf16.msra.mxu0 %v1237
    %1672 = vmatpush.bf16.msra.mxu0 %v1233
    %1673 = vmatpush.bf16.msra.mxu0 %v1229
    %1674 = vmatmul.bf16.gmra.mxu0 %v139
    %v1675 = vpop.f32.mrf.mxu0
    %v1676 = vadd.f32 %v1662, %v1675
    %v1677 = vpop.f32.mrf.mxu0
    %v1678 = vadd.f32 %v1664, %v1677
    %1679 = vdwg.mxu0
    %1680 = vmatpush.bf16.msra.mxu0 %v1066
    %1681 = vmatpush.bf16.msra.mxu0 %v1062
    %1682 = vmatpush.bf16.msra.mxu0 %v1058
    %1683 = vmatpush.bf16.msra.mxu0 %v1054
    %1684 = vmatpush.bf16.msra.mxu0 %v1050
    %1685 = vmatpush.bf16.msra.mxu0 %v1046
    %1686 = vmatpush.bf16.msra.mxu0 %v1042
    %1687 = vmatpush.bf16.msra.mxu0 %v1038
    %1688 = vmatmul.bf16.gmra.mxu0 %v133
    %v1689 = vpop.f32.mrf.mxu0
    %v1690 = vadd.f32 0.0, %v1689
    %v1691 = vpop.f32.mrf.mxu0
    %v1692 = vadd.f32 0.0, %v1691
    %1693 = vdwg.mxu0
    %1694 = vmatpush.bf16.msra.mxu0 %v1098
    %1695 = vmatpush.bf16.msra.mxu0 %v1094
    %1696 = vmatpush.bf16.msra.mxu0 %v1090
    %1697 = vmatpush.bf16.msra.mxu0 %v1086
    %1698 = vmatpush.bf16.msra.mxu0 %v1082
    %1699 = vmatpush.bf16.msra.mxu0 %v1078
    %1700 = vmatpush.bf16.msra.mxu0 %v1074
    %1701 = vmatpush.bf16.msra.mxu0 %v1070
    %1702 = vmatmul.bf16.gmra.mxu0 %v134
    %v1703 = vpop.f32.mrf.mxu0
    %v1704 = vadd.f32 %v1690, %v1703
    %v1705 = vpop.f32.mrf.mxu0
    %v1706 = vadd.f32 %v1692, %v1705
    %1707 = vdwg.mxu0
    %1708 = vmatpush.bf16.msra.mxu0 %v1130
    %1709 = vmatpush.bf16.msra.mxu0 %v1126
    %1710 = vmatpush.bf16.msra.mxu0 %v1122
    %1711 = vmatpush.bf16.msra.mxu0 %v1118
    %1712 = vmatpush.bf16.msra.mxu0 %v1114
    %1713 = vmatpush.bf16.msra.mxu0 %v1110
    %1714 = vmatpush.bf16.msra.mxu0 %v1106
    %1715 = vmatpush.bf16.msra.mxu0 %v1102
    %1716 = vmatmul.bf16.gmra.mxu0 %v135
    %v1717 = vpop.f32.mrf.mxu0
    %v1718 = vadd.f32 %v1704, %v1717
    %v1719 = vpop.f32.mrf.mxu0
    %v1720 = vadd.f32 %v1706, %v1719
    %1721 = vdwg.mxu0
    %1722 = vmatpush.bf16.msra.mxu0 %v1162
    %1723 = vmatpush.bf16.msra.mxu0 %v1158
    %1724 = vmatpush.bf16.msra.mxu0 %v1154
    %1725 = vmatpush.bf16.msra.mxu0 %v1150
    %1726 = vmatpush.bf16.msra.mxu0 %v1146
    %1727 = vmatpush.bf16.msra.mxu0 %v1142
    %1728 = vmatpush.bf16.msra.mxu0 %v1138
    %1729 = vmatpush.bf16.msra.mxu0 %v1134
    %1730 = vmatmul.bf16.gmra.mxu0 %v136
    %v1731 = vpop.f32.mrf.mxu0
    %v1732 = vadd.f32 %v1718, %v1731
    %v1733 = vpop.f32.mrf.mxu0
    %v1734 = vadd.f32 %v1720, %v1733
    %1735 = vdwg.mxu0
    %1736 = vmatpush.bf16.msra.mxu0 %v1194
    %1737 = vmatpush.bf16.msra.mxu0 %v1190
    %1738 = vmatpush.bf16.msra.mxu0 %v1186
    %1739 = vmatpush.bf16.msra.mxu0 %v1182
    %1740 = vmatpush.bf16.msra.mxu0 %v1178
    %1741 = vmatpush.bf16.msra.mxu0 %v1174
    %1742 = vmatpush.bf16.msra.mxu0 %v1170
    %1743 = vmatpush.bf16.msra.mxu0 %v1166
    %1744 = vmatmul.bf16.gmra.mxu0 %v137
    %v1745 = vpop.f32.mrf.mxu0
    %v1746 = vadd.f32 %v1732, %v1745
    %v1747 = vpop.f32.mrf.mxu0
    %v1748 = vadd.f32 %v1734, %v1747
    %1749 = vdwg.mxu0
    %1750 = vmatpush.bf16.msra.mxu0 %v1226
    %1751 = vmatpush.bf16.msra.mxu0 %v1222
    %1752 = vmatpush.bf16.msra.mxu0 %v1218
    %1753 = vmatpush.bf16.msra.mxu0 %v1214
    %1754 = vmatpush.bf16.msra.mxu0 %v1210
    %1755 = vmatpush.bf16.msra.mxu0 %v1206
    %1756 = vmatpush.bf16.msra.mxu0 %v1202
    %1757 = vmatpush.bf16.msra.mxu0 %v1198
    %1758 = vmatmul.bf16.gmra.mxu0 %v138
    %v1759 = vpop.f32.mrf.mxu0
    %v1760 = vadd.f32 %v1746, %v1759
    %v1761 = vpop.f32.mrf.mxu0
    %v1762 = vadd.f32 %v1748, %v1761
    %1763 = vdwg.mxu0
    %1764 = vmatpush.bf16.msra.mxu0 %v1258
    %1765 = vmatpush.bf16.msra.mxu0 %v1254
    %1766 = vmatpush.bf16.msra.mxu0 %v1250
    %1767 = vmatpush.bf16.msra.mxu0 %v1246
    %1768 = vmatpush.bf16.msra.mxu0 %v1242
    %1769 = vmatpush.bf16.msra.mxu0 %v1238
    %1770 = vmatpush.bf16.msra.mxu0 %v1234
    %1771 = vmatpush.bf16.msra.mxu0 %v1230
    %1772 = vmatmul.bf16.gmra.mxu0 %v139
    %v1773 = vpop.f32.mrf.mxu0
    %v1774 = vadd.f32 %v1760, %v1773
    %v1775 = vpop.f32.mrf.mxu0
    %v1776 = vadd.f32 %v1762, %v1775
    %1777 = vdwg.mxu0
    %1778 = vmatpush.bf16.msra.mxu0 %v1067
    %1779 = vmatpush.bf16.msra.mxu0 %v1063
    %1780 = vmatpush.bf16.msra.mxu0 %v1059
    %1781 = vmatpush.bf16.msra.mxu0 %v1055
    %1782 = vmatpush.bf16.msra.mxu0 %v1051
    %1783 = vmatpush.bf16.msra.mxu0 %v1047
    %1784 = vmatpush.bf16.msra.mxu0 %v1043
    %1785 = vmatpush.bf16.msra.mxu0 %v1039
    %1786 = vmatmul.bf16.gmra.mxu0 %v133
    %v1787 = vpop.f32.mrf.mxu0
    %v1788 = vadd.f32 0.0, %v1787
    %v1789 = vpop.f32.mrf.mxu0
    %v1790 = vadd.f32 0.0, %v1789
    %1791 = vdwg.mxu0
    %1792 = vmatpush.bf16.msra.mxu0 %v1099
    %1793 = vmatpush.bf16.msra.mxu0 %v1095
    %1794 = vmatpush.bf16.msra.mxu0 %v1091
    %1795 = vmatpush.bf16.msra.mxu0 %v1087
    %1796 = vmatpush.bf16.msra.mxu0 %v1083
    %1797 = vmatpush.bf16.msra.mxu0 %v1079
    %1798 = vmatpush.bf16.msra.mxu0 %v1075
    %1799 = vmatpush.bf16.msra.mxu0 %v1071
    %1800 = vmatmul.bf16.gmra.mxu0 %v134
    %v1801 = vpop.f32.mrf.mxu0
    %v1802 = vadd.f32 %v1788, %v1801
    %v1803 = vpop.f32.mrf.mxu0
    %v1804 = vadd.f32 %v1790, %v1803
    %1805 = vdwg.mxu0
    %1806 = vmatpush.bf16.msra.mxu0 %v1131
    %1807 = vmatpush.bf16.msra.mxu0 %v1127
    %1808 = vmatpush.bf16.msra.mxu0 %v1123
    %1809 = vmatpush.bf16.msra.mxu0 %v1119
    %1810 = vmatpush.bf16.msra.mxu0 %v1115
    %1811 = vmatpush.bf16.msra.mxu0 %v1111
    %1812 = vmatpush.bf16.msra.mxu0 %v1107
    %1813 = vmatpush.bf16.msra.mxu0 %v1103
    %1814 = vmatmul.bf16.gmra.mxu0 %v135
    %v1815 = vpop.f32.mrf.mxu0
    %v1816 = vadd.f32 %v1802, %v1815
    %v1817 = vpop.f32.mrf.mxu0
    %v1818 = vadd.f32 %v1804, %v1817
    %1819 = vdwg.mxu0
    %1820 = vmatpush.bf16.msra.mxu0 %v1163
    %1821 = vmatpush.bf16.msra.mxu0 %v1159
    %1822 = vmatpush.bf16.msra.mxu0 %v1155
    %1823 = vmatpush.bf16.msra.mxu0 %v1151
    %1824 = vmatpush.bf16.msra.mxu0 %v1147
    %1825 = vmatpush.bf16.msra.mxu0 %v1143
    %1826 = vmatpush.bf16.msra.mxu0 %v1139
    %1827 = vmatpush.bf16.msra.mxu0 %v1135
    %1828 = vmatmul.bf16.gmra.mxu0 %v136
    %v1829 = vpop.f32.mrf.mxu0
    %v1830 = vadd.f32 %v1816, %v1829
    %v1831 = vpop.f32.mrf.mxu0
    %v1832 = vadd.f32 %v1818, %v1831
    %1833 = vdwg.mxu0
    %1834 = vmatpush.bf16.msra.mxu0 %v1195
    %1835 = vmatpush.bf16.msra.mxu0 %v1191
    %1836 = vmatpush.bf16.msra.mxu0 %v1187
    %1837 = vmatpush.bf16.msra.mxu0 %v1183
    %1838 = vmatpush.bf16.msra.mxu0 %v1179
    %1839 = vmatpush.bf16.msra.mxu0 %v1175
    %1840 = vmatpush.bf16.msra.mxu0 %v1171
    %1841 = vmatpush.bf16.msra.mxu0 %v1167
    %1842 = vmatmul.bf16.gmra.mxu0 %v137
    %v1843 = vpop.f32.mrf.mxu0
    %v1844 = vadd.f32 %v1830, %v1843
    %v1845 = vpop.f32.mrf.mxu0
    %v1846 = vadd.f32 %v1832, %v1845
    %1847 = vdwg.mxu0
    %1848 = vmatpush.bf16.msra.mxu0 %v1227
    %1849 = vmatpush.bf16.msra.mxu0 %v1223
    %1850 = vmatpush.bf16.msra.mxu0 %v1219
    %1851 = vmatpush.bf16.msra.mxu0 %v1215
    %1852 = vmatpush.bf16.msra.mxu0 %v1211
    %1853 = vmatpush.bf16.msra.mxu0 %v1207
    %1854 = vmatpush.bf16.msra.mxu0 %v1203
    %1855 = vmatpush.bf16.msra.mxu0 %v1199
    %1856 = vmatmul.bf16.gmra.mxu0 %v138
    %v1857 = vpop.f32.mrf.mxu0
    %v1858 = vadd.f32 %v1844, %v1857
    %v1859 = vpop.f32.mrf.mxu0
    %v1860 = vadd.f32 %v1846, %v1859
    %1861 = vdwg.mxu0
    %1862 = vmatpush.bf16.msra.mxu0 %v1259
    %1863 = vmatpush.bf16.msra.mxu0 %v1255
    %1864 = vmatpush.bf16.msra.mxu0 %v1251
    %1865 = vmatpush.bf16.msra.mxu0 %v1247
    %1866 = vmatpush.bf16.msra.mxu0 %v1243
    %1867 = vmatpush.bf16.msra.mxu0 %v1239
    %1868 = vmatpush.bf16.msra.mxu0 %v1235
    %1869 = vmatpush.bf16.msra.mxu0 %v1231
    %1870 = vmatmul.bf16.gmra.mxu0 %v139
    %v1871 = vpop.f32.mrf.mxu0
    %v1872 = vadd.f32 %v1858, %v1871
    %v1873 = vpop.f32.mrf.mxu0
    %v1874 = vadd.f32 %v1860, %v1873
    %1875 = vdwg.mxu0
    %v1876 = vadd.f32 %v111, %v1578
    %v1877 = vadd.f32 %v112, %v1676
    %v1878 = vadd.f32 %v113, %v1774
    %v1879 = vadd.f32 %v114, %v1872
    %v1880 = vadd.f32 %v115, %v1580
    %v1881 = vadd.f32 %v116, %v1678
    %v1882 = vadd.f32 %v117, %v1776
    %v1883 = vadd.f32 %v118, %v1874
    %1884 = vst [vmem:[#allocation2] sm:$0xff] %v1876
    %1885 = vst [vmem:[#allocation2 + $0x8] sm:$0xff] %v1877
    %1886 = vst [vmem:[#allocation2 + $0x10] sm:$0xff] %v1878
    %1887 = vst [vmem:[#allocation2 + $0x18] sm:$0xff] %v1879
    %1888 = vst [vmem:[#allocation2 + $0x20] sm:$0xff] %v1880
    %1889 = vst [vmem:[#allocation2 + $0x28] sm:$0xff] %v1881
    %1890 = vst [vmem:[#allocation2 + $0x30] sm:$0xff] %v1882
    %1891 = vst [vmem:[#allocation2 + $0x38] sm:$0xff] %v1883
    // Predicated region
    $region50: #{tpu_custom_call.1} parent=1 // pred_check
      %p1892 = pneg %p89
    $region51: #{tpu_custom_call.1} parent=1 // pred_check_branch
      %1894 = sbr.rel (%p1892) target = $region53
    $region52: #{tpu_custom_call.1} parent=1 // pred_region
      %v1895 = vld [vmem:[#allocation2] sm:$0xff]
      %v1896 = vld [vmem:[#allocation2 + $0x8] sm:$0xff]
      %v1897 = vld [vmem:[#allocation2 + $0x10] sm:$0xff]
      %v1898 = vld [vmem:[#allocation2 + $0x18] sm:$0xff]
      %v1899 = vld [vmem:[#allocation2 + $0x20] sm:$0xff]
      %v1900 = vld [vmem:[#allocation2 + $0x28] sm:$0xff]
      %v1901 = vld [vmem:[#allocation2 + $0x30] sm:$0xff]
      %v1902 = vld [vmem:[#allocation2 + $0x38] sm:$0xff]
      %vm1903 = vcmp.gt.f32.partialorder %v1895, 0.0
      %vm1904 = vcmp.gt.f32.partialorder %v1896, 0.0
      %vm1905 = vcmp.gt.f32.partialorder %v1897, 0.0
      %vm1906 = vcmp.gt.f32.partialorder %v1898, 0.0
      %vm1907 = vcmp.gt.f32.partialorder %v1899, 0.0
      %vm1908 = vcmp.gt.f32.partialorder %v1900, 0.0
      %vm1909 = vcmp.gt.f32.partialorder %v1901, 0.0
      %vm1910 = vcmp.gt.f32.partialorder %v1902, 0.0
      %v1911 = vmul.f32 %v1895, 0.2
      %v1912 = vmul.f32 %v1896, 0.2
      %v1913 = vmul.f32 %v1897, 0.2
      %v1914 = vmul.f32 %v1898, 0.2
      %v1915 = vmul.f32 %v1899, 0.2
      %v1916 = vmul.f32 %v1900, 0.2
      %v1917 = vmul.f32 %v1901, 0.2
      %v1918 = vmul.f32 %v1902, 0.2
      %v1919 = vsel %vm1903, %v1895, %v1911
      %v1920 = vsel %vm1904, %v1896, %v1912
      %v1921 = vsel %vm1905, %v1897, %v1913
      %v1922 = vsel %vm1906, %v1898, %v1914
      %v1923 = vsel %vm1907, %v1899, %v1915
      %v1924 = vsel %vm1908, %v1900, %v1916
      %v1925 = vsel %vm1909, %v1901, %v1917
      %v1926 = vsel %vm1910, %v1902, %v1918
      %v1927 = vpack.c.bf16 %v1923, %v1919
      %v1928 = vpack.c.bf16 %v1924, %v1920
      %v1929 = vpack.c.bf16 %v1925, %v1921
      %v1930 = vpack.c.bf16 %v1926, %v1922
      %v1931 = vld [vmem:[#allocation10] sm:$0xff]
      %v1932 = vld [vmem:[#allocation10 + $0x8] sm:$0xff]
      %v1933 = vld [vmem:[#allocation10 + $0x10] sm:$0xff]
      %v1934 = vld [vmem:[#allocation10 + $0x18] sm:$0xff]
      %v1935 = vld [vmem:[#allocation10 + $0x20] sm:$0xff]
      %v1936 = vld [vmem:[#allocation10 + $0x28] sm:$0xff]
      %v1937 = vld [vmem:[#allocation10 + $0x30] sm:$0xff]
      %v1938 = vld [vmem:[#allocation10 + $0x38] sm:$0xff]
      %v1939 = vld [vmem:[#allocation10 + $0x40] sm:$0xff]
      %v1940 = vld [vmem:[#allocation10 + $0x48] sm:$0xff]
      %v1941 = vld [vmem:[#allocation10 + $0x50] sm:$0xff]
      %v1942 = vld [vmem:[#allocation10 + $0x58] sm:$0xff]
      %v1943 = vld [vmem:[#allocation10 + $0x60] sm:$0xff]
      %v1944 = vld [vmem:[#allocation10 + $0x68] sm:$0xff]
      %v1945 = vld [vmem:[#allocation10 + $0x70] sm:$0xff]
      %v1946 = vld [vmem:[#allocation10 + $0x78] sm:$0xff]
      %v1947 = vld [vmem:[#allocation10 + $0x80] sm:$0xff]
      %v1948 = vld [vmem:[#allocation10 + $0x88] sm:$0xff]
      %v1949 = vld [vmem:[#allocation10 + $0x90] sm:$0xff]
      %v1950 = vld [vmem:[#allocation10 + $0x98] sm:$0xff]
      %v1951 = vld [vmem:[#allocation10 + $0xa0] sm:$0xff]
      %v1952 = vld [vmem:[#allocation10 + $0xa8] sm:$0xff]
      %v1953 = vld [vmem:[#allocation10 + $0xb0] sm:$0xff]
      %v1954 = vld [vmem:[#allocation10 + $0xb8] sm:$0xff]
      %v1955 = vld [vmem:[#allocation10 + $0xc0] sm:$0xff]
      %v1956 = vld [vmem:[#allocation10 + $0xc8] sm:$0xff]
      %v1957 = vld [vmem:[#allocation10 + $0xd0] sm:$0xff]
      %v1958 = vld [vmem:[#allocation10 + $0xd8] sm:$0xff]
      %v1959 = vld [vmem:[#allocation10 + $0xe0] sm:$0xff]
      %v1960 = vld [vmem:[#allocation10 + $0xe8] sm:$0xff]
      %v1961 = vld [vmem:[#allocation10 + $0xf0] sm:$0xff]
      %v1962 = vld [vmem:[#allocation10 + $0xf8] sm:$0xff]
      %v1963 = vld [vmem:[#allocation10 + $0x100] sm:$0xff]
      %v1964 = vld [vmem:[#allocation10 + $0x108] sm:$0xff]
      %v1965 = vld [vmem:[#allocation10 + $0x110] sm:$0xff]
      %v1966 = vld [vmem:[#allocation10 + $0x118] sm:$0xff]
      %v1967 = vld [vmem:[#allocation10 + $0x120] sm:$0xff]
      %v1968 = vld [vmem:[#allocation10 + $0x128] sm:$0xff]
      %v1969 = vld [vmem:[#allocation10 + $0x130] sm:$0xff]
      %v1970 = vld [vmem:[#allocation10 + $0x138] sm:$0xff]
      %v1971 = vld [vmem:[#allocation10 + $0x140] sm:$0xff]
      %v1972 = vld [vmem:[#allocation10 + $0x148] sm:$0xff]
      %v1973 = vld [vmem:[#allocation10 + $0x150] sm:$0xff]
      %v1974 = vld [vmem:[#allocation10 + $0x158] sm:$0xff]
      %v1975 = vld [vmem:[#allocation10 + $0x160] sm:$0xff]
      %v1976 = vld [vmem:[#allocation10 + $0x168] sm:$0xff]
      %v1977 = vld [vmem:[#allocation10 + $0x170] sm:$0xff]
      %v1978 = vld [vmem:[#allocation10 + $0x178] sm:$0xff]
      %v1979 = vld [vmem:[#allocation10 + $0x180] sm:$0xff]
      %v1980 = vld [vmem:[#allocation10 + $0x188] sm:$0xff]
      %v1981 = vld [vmem:[#allocation10 + $0x190] sm:$0xff]
      %v1982 = vld [vmem:[#allocation10 + $0x198] sm:$0xff]
      %v1983 = vld [vmem:[#allocation10 + $0x1a0] sm:$0xff]
      %v1984 = vld [vmem:[#allocation10 + $0x1a8] sm:$0xff]
      %v1985 = vld [vmem:[#allocation10 + $0x1b0] sm:$0xff]
      %v1986 = vld [vmem:[#allocation10 + $0x1b8] sm:$0xff]
      %v1987 = vld [vmem:[#allocation10 + $0x1c0] sm:$0xff]
      %v1988 = vld [vmem:[#allocation10 + $0x1c8] sm:$0xff]
      %v1989 = vld [vmem:[#allocation10 + $0x1d0] sm:$0xff]
      %v1990 = vld [vmem:[#allocation10 + $0x1d8] sm:$0xff]
      %v1991 = vld [vmem:[#allocation10 + $0x1e0] sm:$0xff]
      %v1992 = vld [vmem:[#allocation10 + $0x1e8] sm:$0xff]
      %v1993 = vld [vmem:[#allocation10 + $0x1f0] sm:$0xff]
      %v1994 = vld [vmem:[#allocation10 + $0x1f8] sm:$0xff]
      %v1995 = vld [vmem:[%s4] sm:$0x3]
      %v1997 = vperm.slane %v1995, 0
      %v1998 = vperm.slane %v1995, 1
      %v2065 = vunpack.c.l.b16 %v1931
      %v2066 = vunpack.c.h.b16 %v1931
      %v2067 = vunpack.c.l.b16 %v1932
      %v2068 = vunpack.c.h.b16 %v1932
      %v2069 = vunpack.c.l.b16 %v1933
      %v2070 = vunpack.c.h.b16 %v1933
      %v2071 = vunpack.c.l.b16 %v1934
      %v2072 = vunpack.c.h.b16 %v1934
      %v2073 = vunpack.c.l.b16 %v1935
      %v2074 = vunpack.c.h.b16 %v1935
      %v2075 = vunpack.c.l.b16 %v1936
      %v2076 = vunpack.c.h.b16 %v1936
      %v2077 = vunpack.c.l.b16 %v1937
      %v2078 = vunpack.c.h.b16 %v1937
      %v2079 = vunpack.c.l.b16 %v1938
      %v2080 = vunpack.c.h.b16 %v1938
      %v2081 = vunpack.c.l.b16 %v1939
      %v2082 = vunpack.c.h.b16 %v1939
      %v2083 = vunpack.c.l.b16 %v1940
      %v2084 = vunpack.c.h.b16 %v1940
      %v2085 = vunpack.c.l.b16 %v1941
      %v2086 = vunpack.c.h.b16 %v1941
      %v2087 = vunpack.c.l.b16 %v1942
      %v2088 = vunpack.c.h.b16 %v1942
      %v2089 = vunpack.c.l.b16 %v1943
      %v2090 = vunpack.c.h.b16 %v1943
      %v2091 = vunpack.c.l.b16 %v1944
      %v2092 = vunpack.c.h.b16 %v1944
      %v2093 = vunpack.c.l.b16 %v1945
      %v2094 = vunpack.c.h.b16 %v1945
      %v2095 = vunpack.c.l.b16 %v1946
      %v2096 = vunpack.c.h.b16 %v1946
      %v2097 = vunpack.c.l.b16 %v1947
      %v2098 = vunpack.c.h.b16 %v1947
      %v2099 = vunpack.c.l.b16 %v1948
      %v2100 = vunpack.c.h.b16 %v1948
      %v2101 = vunpack.c.l.b16 %v1949
      %v2102 = vunpack.c.h.b16 %v1949
      %v2103 = vunpack.c.l.b16 %v1950
      %v2104 = vunpack.c.h.b16 %v1950
      %v2105 = vunpack.c.l.b16 %v1951
      %v2106 = vunpack.c.h.b16 %v1951
      %v2107 = vunpack.c.l.b16 %v1952
      %v2108 = vunpack.c.h.b16 %v1952
      %v2109 = vunpack.c.l.b16 %v1953
      %v2110 = vunpack.c.h.b16 %v1953
      %v2111 = vunpack.c.l.b16 %v1954
      %v2112 = vunpack.c.h.b16 %v1954
      %v2113 = vunpack.c.l.b16 %v1955
      %v2114 = vunpack.c.h.b16 %v1955
      %v2115 = vunpack.c.l.b16 %v1956
      %v2116 = vunpack.c.h.b16 %v1956
      %v2117 = vunpack.c.l.b16 %v1957
      %v2118 = vunpack.c.h.b16 %v1957
      %v2119 = vunpack.c.l.b16 %v1958
      %v2120 = vunpack.c.h.b16 %v1958
      %v2121 = vunpack.c.l.b16 %v1959
      %v2122 = vunpack.c.h.b16 %v1959
      %v2123 = vunpack.c.l.b16 %v1960
      %v2124 = vunpack.c.h.b16 %v1960
      %v2125 = vunpack.c.l.b16 %v1961
      %v2126 = vunpack.c.h.b16 %v1961
      %v2127 = vunpack.c.l.b16 %v1962
      %v2128 = vunpack.c.h.b16 %v1962
      %v2129 = vunpack.c.l.b16 %v1963
      %v2130 = vunpack.c.h.b16 %v1963
      %v2131 = vunpack.c.l.b16 %v1964
      %v2132 = vunpack.c.h.b16 %v1964
      %v2133 = vunpack.c.l.b16 %v1965
      %v2134 = vunpack.c.h.b16 %v1965
      %v2135 = vunpack.c.l.b16 %v1966
      %v2136 = vunpack.c.h.b16 %v1966
      %v2137 = vunpack.c.l.b16 %v1967
      %v2138 = vunpack.c.h.b16 %v1967
      %v2139 = vunpack.c.l.b16 %v1968
      %v2140 = vunpack.c.h.b16 %v1968
      %v2141 = vunpack.c.l.b16 %v1969
      %v2142 = vunpack.c.h.b16 %v1969
      %v2143 = vunpack.c.l.b16 %v1970
      %v2144 = vunpack.c.h.b16 %v1970
      %v2145 = vunpack.c.l.b16 %v1971
      %v2146 = vunpack.c.h.b16 %v1971
      %v2147 = vunpack.c.l.b16 %v1972
      %v2148 = vunpack.c.h.b16 %v1972
      %v2149 = vunpack.c.l.b16 %v1973
      %v2150 = vunpack.c.h.b16 %v1973
      %v2151 = vunpack.c.l.b16 %v1974
      %v2152 = vunpack.c.h.b16 %v1974
      %v2153 = vunpack.c.l.b16 %v1975
      %v2154 = vunpack.c.h.b16 %v1975
      %v2155 = vunpack.c.l.b16 %v1976
      %v2156 = vunpack.c.h.b16 %v1976
      %v2157 = vunpack.c.l.b16 %v1977
      %v2158 = vunpack.c.h.b16 %v1977
      %v2159 = vunpack.c.l.b16 %v1978
      %v2160 = vunpack.c.h.b16 %v1978
      %v2161 = vunpack.c.l.b16 %v1979
      %v2162 = vunpack.c.h.b16 %v1979
      %v2163 = vunpack.c.l.b16 %v1980
      %v2164 = vunpack.c.h.b16 %v1980
      %v2165 = vunpack.c.l.b16 %v1981
      %v2166 = vunpack.c.h.b16 %v1981
      %v2167 = vunpack.c.l.b16 %v1982
      %v2168 = vunpack.c.h.b16 %v1982
      %v2169 = vunpack.c.l.b16 %v1983
      %v2170 = vunpack.c.h.b16 %v1983
      %v2171 = vunpack.c.l.b16 %v1984
      %v2172 = vunpack.c.h.b16 %v1984
      %v2173 = vunpack.c.l.b16 %v1985
      %v2174 = vunpack.c.h.b16 %v1985
      %v2175 = vunpack.c.l.b16 %v1986
      %v2176 = vunpack.c.h.b16 %v1986
      %v2177 = vunpack.c.l.b16 %v1987
      %v2178 = vunpack.c.h.b16 %v1987
      %v2179 = vunpack.c.l.b16 %v1988
      %v2180 = vunpack.c.h.b16 %v1988
      %v2181 = vunpack.c.l.b16 %v1989
      %v2182 = vunpack.c.h.b16 %v1989
      %v2183 = vunpack.c.l.b16 %v1990
      %v2184 = vunpack.c.h.b16 %v1990
      %v2185 = vunpack.c.l.b16 %v1991
      %v2186 = vunpack.c.h.b16 %v1991
      %v2187 = vunpack.c.l.b16 %v1992
      %v2188 = vunpack.c.h.b16 %v1992
      %v2189 = vunpack.c.l.b16 %v1993
      %v2190 = vunpack.c.h.b16 %v1993
      %v2191 = vunpack.c.l.b16 %v1994
      %v2192 = vunpack.c.h.b16 %v1994
      %v2193 = vpack.c.b16 %v2067, %v2065
      %v2194 = vpack.c.b16 %v2068, %v2066
      %v2195 = vpack.c.b16 %v2071, %v2069
      %v2196 = vpack.c.b16 %v2072, %v2070
      %v2197 = vpack.c.b16 %v2075, %v2073
      %v2198 = vpack.c.b16 %v2076, %v2074
      %v2199 = vpack.c.b16 %v2079, %v2077
      %v2200 = vpack.c.b16 %v2080, %v2078
      %v2201 = vpack.c.b16 %v2083, %v2081
      %v2202 = vpack.c.b16 %v2084, %v2082
      %v2203 = vpack.c.b16 %v2087, %v2085
      %v2204 = vpack.c.b16 %v2088, %v2086
      %v2205 = vpack.c.b16 %v2091, %v2089
      %v2206 = vpack.c.b16 %v2092, %v2090
      %v2207 = vpack.c.b16 %v2095, %v2093
      %v2208 = vpack.c.b16 %v2096, %v2094
      %v2209 = vpack.c.b16 %v2099, %v2097
      %v2210 = vpack.c.b16 %v2100, %v2098
      %v2211 = vpack.c.b16 %v2103, %v2101
      %v2212 = vpack.c.b16 %v2104, %v2102
      %v2213 = vpack.c.b16 %v2107, %v2105
      %v2214 = vpack.c.b16 %v2108, %v2106
      %v2215 = vpack.c.b16 %v2111, %v2109
      %v2216 = vpack.c.b16 %v2112, %v2110
      %v2217 = vpack.c.b16 %v2115, %v2113
      %v2218 = vpack.c.b16 %v2116, %v2114
      %v2219 = vpack.c.b16 %v2119, %v2117
      %v2220 = vpack.c.b16 %v2120, %v2118
      %v2221 = vpack.c.b16 %v2123, %v2121
      %v2222 = vpack.c.b16 %v2124, %v2122
      %v2223 = vpack.c.b16 %v2127, %v2125
      %v2224 = vpack.c.b16 %v2128, %v2126
      %v2225 = vpack.c.b16 %v2131, %v2129
      %v2226 = vpack.c.b16 %v2132, %v2130
      %v2227 = vpack.c.b16 %v2135, %v2133
      %v2228 = vpack.c.b16 %v2136, %v2134
      %v2229 = vpack.c.b16 %v2139, %v2137
      %v2230 = vpack.c.b16 %v2140, %v2138
      %v2231 = vpack.c.b16 %v2143, %v2141
      %v2232 = vpack.c.b16 %v2144, %v2142
      %v2233 = vpack.c.b16 %v2147, %v2145
      %v2234 = vpack.c.b16 %v2148, %v2146
      %v2235 = vpack.c.b16 %v2151, %v2149
      %v2236 = vpack.c.b16 %v2152, %v2150
      %v2237 = vpack.c.b16 %v2155, %v2153
      %v2238 = vpack.c.b16 %v2156, %v2154
      %v2239 = vpack.c.b16 %v2159, %v2157
      %v2240 = vpack.c.b16 %v2160, %v2158
      %v2241 = vpack.c.b16 %v2163, %v2161
      %v2242 = vpack.c.b16 %v2164, %v2162
      %v2243 = vpack.c.b16 %v2167, %v2165
      %v2244 = vpack.c.b16 %v2168, %v2166
      %v2245 = vpack.c.b16 %v2171, %v2169
      %v2246 = vpack.c.b16 %v2172, %v2170
      %v2247 = vpack.c.b16 %v2175, %v2173
      %v2248 = vpack.c.b16 %v2176, %v2174
      %v2249 = vpack.c.b16 %v2179, %v2177
      %v2250 = vpack.c.b16 %v2180, %v2178
      %v2251 = vpack.c.b16 %v2183, %v2181
      %v2252 = vpack.c.b16 %v2184, %v2182
      %v2253 = vpack.c.b16 %v2187, %v2185
      %v2254 = vpack.c.b16 %v2188, %v2186
      %v2255 = vpack.c.b16 %v2191, %v2189
      %v2256 = vpack.c.b16 %v2192, %v2190
      %2321 = vmatpush.bf16.msra.mxu0 %v2207
      %2322 = vmatpush.bf16.msra.mxu0 %v2205
      %2323 = vmatpush.bf16.msra.mxu0 %v2203
      %2324 = vmatpush.bf16.msra.mxu0 %v2201
      %2325 = vmatpush.bf16.msra.mxu0 %v2199
      %2326 = vmatpush.bf16.msra.mxu0 %v2197
      %2327 = vmatpush.bf16.msra.mxu0 %v2195
      %2328 = vmatpush.bf16.msra.mxu0 %v2193
      %2329 = vmatmul.bf16.gmra.mxu0 %v1927
      %v2330 = vpop.f32.mrf.mxu0
      %v2331 = vadd.f32 %v1997, %v2330
      %v2332 = vpop.f32.mrf.mxu0
      %v2333 = vadd.f32 %v1997, %v2332
      %2334 = vdwg.mxu0
      %2335 = vmatpush.bf16.msra.mxu0 %v2223
      %2336 = vmatpush.bf16.msra.mxu0 %v2221
      %2337 = vmatpush.bf16.msra.mxu0 %v2219
      %2338 = vmatpush.bf16.msra.mxu0 %v2217
      %2339 = vmatpush.bf16.msra.mxu0 %v2215
      %2340 = vmatpush.bf16.msra.mxu0 %v2213
      %2341 = vmatpush.bf16.msra.mxu0 %v2211
      %2342 = vmatpush.bf16.msra.mxu0 %v2209
      %2343 = vmatmul.bf16.gmra.mxu0 %v1928
      %v2344 = vpop.f32.mrf.mxu0
      %v2345 = vadd.f32 %v2331, %v2344
      %v2346 = vpop.f32.mrf.mxu0
      %v2347 = vadd.f32 %v2333, %v2346
      %2348 = vdwg.mxu0
      %2349 = vmatpush.bf16.msra.mxu0 %v2239
      %2350 = vmatpush.bf16.msra.mxu0 %v2237
      %2351 = vmatpush.bf16.msra.mxu0 %v2235
      %2352 = vmatpush.bf16.msra.mxu0 %v2233
      %2353 = vmatpush.bf16.msra.mxu0 %v2231
      %2354 = vmatpush.bf16.msra.mxu0 %v2229
      %2355 = vmatpush.bf16.msra.mxu0 %v2227
      %2356 = vmatpush.bf16.msra.mxu0 %v2225
      %2357 = vmatmul.bf16.gmra.mxu0 %v1929
      %v2358 = vpop.f32.mrf.mxu0
      %v2359 = vadd.f32 %v2345, %v2358
      %v2360 = vpop.f32.mrf.mxu0
      %v2361 = vadd.f32 %v2347, %v2360
      %2362 = vdwg.mxu0
      %2363 = vmatpush.bf16.msra.mxu0 %v2255
      %2364 = vmatpush.bf16.msra.mxu0 %v2253
      %2365 = vmatpush.bf16.msra.mxu0 %v2251
      %2366 = vmatpush.bf16.msra.mxu0 %v2249
      %2367 = vmatpush.bf16.msra.mxu0 %v2247
      %2368 = vmatpush.bf16.msra.mxu0 %v2245
      %2369 = vmatpush.bf16.msra.mxu0 %v2243
      %2370 = vmatpush.bf16.msra.mxu0 %v2241
      %2371 = vmatmul.bf16.gmra.mxu0 %v1930
      %v2372 = vpop.f32.mrf.mxu0
      %v2373 = vadd.f32 %v2359, %v2372
      %v2374 = vpop.f32.mrf.mxu0
      %v2375 = vadd.f32 %v2361, %v2374
      %2376 = vdwg.mxu0
      %2377 = vmatpush.bf16.msra.mxu0 %v2208
      %2378 = vmatpush.bf16.msra.mxu0 %v2206
      %2379 = vmatpush.bf16.msra.mxu0 %v2204
      %2380 = vmatpush.bf16.msra.mxu0 %v2202
      %2381 = vmatpush.bf16.msra.mxu0 %v2200
      %2382 = vmatpush.bf16.msra.mxu0 %v2198
      %2383 = vmatpush.bf16.msra.mxu0 %v2196
      %2384 = vmatpush.bf16.msra.mxu0 %v2194
      %2385 = vmatmul.bf16.gmra.mxu0 %v1927
      %v2386 = vpop.f32.mrf.mxu0
      %v2387 = vadd.f32 %v1998, %v2386
      %v2388 = vpop.f32.mrf.mxu0
      %v2389 = vadd.f32 %v1998, %v2388
      %2390 = vdwg.mxu0
      %2391 = vmatpush.bf16.msra.mxu0 %v2224
      %2392 = vmatpush.bf16.msra.mxu0 %v2222
      %2393 = vmatpush.bf16.msra.mxu0 %v2220
      %2394 = vmatpush.bf16.msra.mxu0 %v2218
      %2395 = vmatpush.bf16.msra.mxu0 %v2216
      %2396 = vmatpush.bf16.msra.mxu0 %v2214
      %2397 = vmatpush.bf16.msra.mxu0 %v2212
      %2398 = vmatpush.bf16.msra.mxu0 %v2210
      %2399 = vmatmul.bf16.gmra.mxu0 %v1928
      %v2400 = vpop.f32.mrf.mxu0
      %v2401 = vadd.f32 %v2387, %v2400
      %v2402 = vpop.f32.mrf.mxu0
      %v2403 = vadd.f32 %v2389, %v2402
      %2404 = vdwg.mxu0
      %2405 = vmatpush.bf16.msra.mxu0 %v2240
      %2406 = vmatpush.bf16.msra.mxu0 %v2238
      %2407 = vmatpush.bf16.msra.mxu0 %v2236
      %2408 = vmatpush.bf16.msra.mxu0 %v2234
      %2409 = vmatpush.bf16.msra.mxu0 %v2232
      %2410 = vmatpush.bf16.msra.mxu0 %v2230
      %2411 = vmatpush.bf16.msra.mxu0 %v2228
      %2412 = vmatpush.bf16.msra.mxu0 %v2226
      %2413 = vmatmul.bf16.gmra.mxu0 %v1929
      %v2414 = vpop.f32.mrf.mxu0
      %v2415 = vadd.f32 %v2401, %v2414
      %v2416 = vpop.f32.mrf.mxu0
      %v2417 = vadd.f32 %v2403, %v2416
      %2418 = vdwg.mxu0
      %2419 = vmatpush.bf16.msra.mxu0 %v2256
      %2420 = vmatpush.bf16.msra.mxu0 %v2254
      %2421 = vmatpush.bf16.msra.mxu0 %v2252
      %2422 = vmatpush.bf16.msra.mxu0 %v2250
      %2423 = vmatpush.bf16.msra.mxu0 %v2248
      %2424 = vmatpush.bf16.msra.mxu0 %v2246
      %2425 = vmatpush.bf16.msra.mxu0 %v2244
      %2426 = vmatpush.bf16.msra.mxu0 %v2242
      %2427 = vmatmul.bf16.gmra.mxu0 %v1930
      %v2428 = vpop.f32.mrf.mxu0
      %v2429 = vadd.f32 %v2415, %v2428
      %v2430 = vpop.f32.mrf.mxu0
      %v2431 = vadd.f32 %v2417, %v2430
      %2432 = vdwg.mxu0
      %vm2433 = vcmp.gt.f32.partialorder %v2373, 0.0
      %vm2434 = vcmp.gt.f32.partialorder %v2429, 0.0
      %vm2435 = vcmp.gt.f32.partialorder %v2375, 0.0
      %vm2436 = vcmp.gt.f32.partialorder %v2431, 0.0
      %v2437 = vmul.f32 %v2373, 0.2
      %v2438 = vmul.f32 %v2429, 0.2
      %v2439 = vmul.f32 %v2375, 0.2
      %v2440 = vmul.f32 %v2431, 0.2
      %v2441 = vsel %vm2433, %v2373, %v2437
      %v2442 = vsel %vm2434, %v2429, %v2438
      %v2443 = vsel %vm2435, %v2375, %v2439
      %v2444 = vsel %vm2436, %v2431, %v2440
      %v2445 = vld [vmem:[%s5] sm:$0x3]
      %v2447 = vperm.slane %v2445, 0
      %v2448 = vperm.slane %v2445, 1
      %v2451 = vmul.f32 %v2441, %v2447
      %v2452 = vmul.f32 %v2442, %v2448
      %v2453 = vmul.f32 %v2443, %v2447
      %v2454 = vmul.f32 %v2444, %v2448
      %v2455 = vadd.f32 %v2451, %v2452
      %2456 = vadd.xlane.f32.xlu0 %v2455
      %v2457 = vpop.xlane.xlu0 %2456
      %v2458 = vadd.f32 %v2453, %v2454
      %2459 = vadd.xlane.f32.xlu0 %v2458
      %v2460 = vpop.xlane.xlu0 %2459
      %s2461 = sld [smem:[#allocation3]]
      %v2462 = vstv %s2461
      %v2463 = vadd.f32 %v2457, %v2462
      %v2464 = vadd.f32 %v2460, %v2462
      %v2465 = vsub.f32 0.0, %v2463
      %v2466 = vsub.f32 0.0, %v2464
      %v2467 = vmul.f32 %v2465, 1.442695
      %v2468 = vpow.pop %v2467
      %v2469 = vmul.f32 %v2466, 1.442695
      %v2470 = vpow.pop %v2469
      %v2471 = vadd.f32 %v2468, 1.0
      %v2472 = vadd.f32 %v2470, 1.0
      %v2473 = vrcp.pop %v2471
      %v2474 = vmul.f32 %v2471, %v2473
      %v2475 = vsub.f32 1.0, %v2474
      %v2476 = vmul.f32 %v2473, %v2475
      %v2477 = vadd.f32 %v2473, %v2476
      %vm2478 = vweird.f32 %v2471
      %vm2479 = vweird.f32 %v2473
      %vm2480 = vmor %vm2478, %vm2479
      %v2481 = vsel %vm2480, %v2473, %v2477
      %v2482 = vand.u32 2147483647, %v2471
      %vm2483 = vcmp.eq.f32.partialorder %v2482, 8.507059e+37
      %v2484 = vand.u32 %v2471, 2147483648
      %v2485 = vor.u32 1.1754944e-38, %v2484
      %v2486 = vsel %vm2483, %v2485, %v2481
      %v2487 = vrcp.pop %v2472
      %v2488 = vmul.f32 %v2472, %v2487
      %v2489 = vsub.f32 1.0, %v2488
      %v2490 = vmul.f32 %v2487, %v2489
      %v2491 = vadd.f32 %v2487, %v2490
      %vm2492 = vweird.f32 %v2472
      %vm2493 = vweird.f32 %v2487
      %vm2494 = vmor %vm2492, %vm2493
      %v2495 = vsel %vm2494, %v2487, %v2491
      %v2496 = vand.u32 2147483647, %v2472
      %vm2497 = vcmp.eq.f32.partialorder %v2496, 8.507059e+37
      %v2498 = vand.u32 %v2472, 2147483648
      %v2499 = vor.u32 1.1754944e-38, %v2498
      %v2500 = vsel %vm2497, %v2499, %v2495
      %2501 = vst [vmem:[#allocation12] sm:$0xff] %v2486
      %2502 = vst [vmem:[#allocation12 + $0x8] sm:$0xff] %v2500
    $region53: #{tpu_custom_call.1} parent=1 // pred_fallthru
      _
    // Predicated region
    $region54: #{tpu_custom_call.1} parent=1 // pred_check
      _
    $region55: #{tpu_custom_call.1} parent=1 // pred_check_branch
      %2504 = sbr.rel (0) target = $region57
    $region56: #{tpu_custom_call.1} parent=1 // pred_region
      %2506 = vsyncadd [#allocation6], 0
      %s2507 = sshll.u32 [#allocation12], 4
      %s2508 = int_to_ptr.vmem [resolvable:$true] %s2507
      %s2509 = sshll.u32 %s7, 4
      %s2510 = int_to_ptr.hbm [resolvable:$true] %s2509
      %2515 = dma.vmem_to_hbm [thread:$0]  %s2508, 256, %s2510, [#allocation6], 128, 128, 8
    $region57: #{tpu_custom_call.1} parent=1 // pred_fallthru
      _
    // Predicated region
    $region58: #{tpu_custom_call.1} parent=1 // pred_check
      _
    $region59: #{tpu_custom_call.1} parent=1 // pred_check_branch
      %2517 = sbr.rel (0) target = $region61
    $region60: #{tpu_custom_call.1} parent=1 // pred_region
      %2519 = dma.done [#allocation6], 256
    $region61: #{tpu_custom_call.1} parent=1 // pred_fallthru
      _
    %2520 = vsyncpa [#allocation5], 1
    %2521 = vsyncpa [#allocation8], 1
    %2522 = vsyncpa [#allocation11], 1
    %2523 = vsyncpa [#allocation6], 1

</llo_original>
